<compile_context>
chip_gen: v6e
topology: v6e:2x2x1
jax: 0.10.0
libtpu: 0.0.40
codegen_flags: <defaults>
</compile_context>

<pallas_src>
import jax
import jax.numpy as jnp
from jax.experimental import pallas as pl
from jax.experimental.pallas import tpu as pltpu

# ---------------- configuration (small, consistent with the module) ------------
B = 2              # batch
S = 8              # sequence length
H = 32             # hidden_size (stands in for 1024)
NUM_CLASSES = 3
VOCAB = 64
B_PAD = 8          # batch padded to a full sublane tile
G = 8 * H          # fused gate width: [i_f,i_b,f_f,f_b,o_f,o_b,g_f,g_b]
LANE_OUT = 128     # lane-dense padded logits width

assert H & (H - 1) == 0, "direction-mask trick below assumes H is a power of two"


def _sigmoid(z):
    # One EUP op (tanh) instead of exp + divide; numerically safe for large |z|.
    return 0.5 * (jnp.tanh(0.5 * z) + 1.0)


# -------- Pallas kernel: embedding gather + bi-LSTM (layer 0) + dense head -------
def lstm_head_kernel(ids_ref, mask_ref, emb_ref, w_ih_ref, w_hh_ref, b_ref,
                     w_d_ref, b_d_ref, out_ref, x_ref, gx_ref):
    # 1) Fused "roberta stub": gather token embeddings, apply the attention mask,
    #    lay the sequence out time-major with the batch padded to a full 8-row
    #    sublane tile.  Rows for padded batch entries stay zero.
    x_ref[...] = jnp.zeros_like(x_ref)
    for t in range(S):
        for b in range(B):
            tok = ids_ref[b, t]                        # SMEM scalar (int32)
            m = mask_ref[b, t]                         # SMEM scalar (f32)
            x_ref[pl.ds(t * B_PAD + b, 1), :] = emb_ref[tok] * m   # (1, H)

    # 2) De-duplicated input projection: ONE MXU matmul covers every timestep and
    #    BOTH directions (b_ih + b_hh pre-folded).  gx row-block t holds the
    #    projections of x(t) into all 8 gate column groups.
    gx_ref[...] = (jnp.dot(x_ref[...], w_ih_ref[...],
                           preferred_element_type=jnp.float32) + b_ref[...])

    # Column-group direction mask: groups 0,2,4,6 -> forward, 1,3,5,7 -> backward.
    col = jax.lax.broadcasted_iota(jnp.int32, (B_PAD, G), 1)
    is_fwd = (col & H) == 0                            # H is a power of two

    w_hh = w_hh_ref[...]                               # (2H, 8H) block-diagonal
    h = jnp.zeros((B_PAD, 2 * H), jnp.float32)         # [h_f | h_b]
    c = jnp.zeros((B_PAD, 2 * H), jnp.float32)         # [c_f | c_b]

    # 3) Recurrence: static unroll (S is small); one MXU push + one sigmoid slab +
    #    two tanh per step.  Forward gates read gx(t), backward gates read
    #    gx(S-1-t); the select has no dependence on h so it hides under the chain.
    for t in range(S):
        gx_t = jnp.where(is_fwd,
                         gx_ref[pl.ds(t * B_PAD, B_PAD), :],
                         gx_ref[pl.ds((S - 1 - t) * B_PAD, B_PAD), :])
        gates = gx_t + jnp.dot(h, w_hh, preferred_element_type=jnp.float32)
        sg = _sigmoid(gates[:, 0:6 * H])               # [i_f,i_b,f_f,f_b,o_f,o_b]
        g = jnp.tanh(gates[:, 6 * H:8 * H])            # [g_f, g_b]
        i_gate = sg[:, 0:2 * H]
        f_gate = sg[:, 2 * H:4 * H]
        o_gate = sg[:, 4 * H:6 * H]
        c = f_gate * c + i_gate * g
        h = o_gate * jnp.tanh(c)

    # h == torch.cat((last_hidden[0], last_hidden[1]), dim=1)  (padded batch rows
    # hold garbage that never feeds real rows and is sliced off on the host).
    # 4) Fused dense head, lane-dense (B_PAD, 128) store.
    out_ref[...] = (jnp.dot(h, w_d_ref[...],
                            preferred_element_type=jnp.float32) + b_d_ref[...])


def lstm_head(token_ids, attention_mask_f32, emb_table_3d, folded_params):
    w_ih, w_hh, b_g, w_d, b_d = folded_params
    smem = pl.BlockSpec(memory_space=pltpu.MemorySpace.SMEM)
    vmem = pl.BlockSpec(memory_space=pltpu.MemorySpace.VMEM)
    return pl.pallas_call(
        lstm_head_kernel,
        out_shape=jax.ShapeDtypeStruct((B_PAD, LANE_OUT), jnp.float32),
        in_specs=[smem, smem, vmem, vmem, vmem, vmem, vmem, vmem],   # 8 specs = 8 inputs
        out_specs=vmem,
        scratch_shapes=[
            pltpu.VMEM((S * B_PAD, H), jnp.float32),   # x slab (time-major, padded batch)
            pltpu.VMEM((S * B_PAD, G), jnp.float32),   # gx = x @ W_ih + b
        ],
    )(token_ids, attention_mask_f32, emb_table_3d, w_ih, w_hh, b_g, w_d, b_d)


# ---------------- parameter setup (PyTorch layout) + offline folding ------------
def make_params(key):
    """Raw parameters in PyTorch nn.LSTM / nn.Linear layout (layer 0 only)."""
    ks = jax.random.split(key, 10)
    lim = 1.0 / jnp.sqrt(jnp.float32(H))

    def u(k, shape):
        return jax.random.uniform(k, shape, jnp.float32, -lim, lim)

    w_ih_f = u(ks[0], (4 * H, H)); w_hh_f = u(ks[1], (4 * H, H))
    b_ih_f = u(ks[2], (4 * H,));   b_hh_f = u(ks[3], (4 * H,))
    w_ih_b = u(ks[4], (4 * H, H)); w_hh_b = u(ks[5], (4 * H, H))
    b_ih_b = u(ks[6], (4 * H,));   b_hh_b = u(ks[7], (4 * H,))
    w_dense = u(ks[8], (NUM_CLASSES, 2 * H))
    b_dense = u(ks[9], (NUM_CLASSES,))
    return (w_ih_f, w_hh_f, b_ih_f, b_hh_f,
            w_ih_b, w_hh_b, b_ih_b, b_hh_b, w_dense, b_dense)


def fold_params(raw):
    """Offline algebraic folding into the kernel's fused layout.

    Gate column groups (each H wide):  [i_f, i_b, f_f, f_b, o_f, o_b, g_f, g_b]
      - sigmoid gates contiguous in lanes 0:6H, tanh gates in 6H:8H
      - even groups = forward direction, odd groups = backward direction
    W_ih is DENSE (H, 8H) (x feeds both directions -> no zero block, half the
    bytes/MACs of a block-diagonal form); W_hh is block-diagonal (2H, 8H);
    b = b_ih + b_hh; dense head zero-padded to 128 output lanes.
    """
    (w_ih_f, w_hh_f, b_ih_f, b_hh_f,
     w_ih_b, w_hh_b, b_ih_b, b_hh_b, w_dense, b_dense) = raw

    # (direction, PyTorch gate row-block) per column group; PyTorch order i,f,g,o.
    order = [(0, 0), (1, 0), (0, 1), (1, 1), (0, 3), (1, 3), (0, 2), (1, 2)]

    w_ih = jnp.zeros((H, G), jnp.float32)
    w_hh = jnp.zeros((2 * H, G), jnp.float32)
    b_g = jnp.zeros((G,), jnp.float32)
    for grp, (d, gate) in enumerate(order):
        cols = slice(grp * H, (grp + 1) * H)
        rows = slice(gate * H, (gate + 1) * H)
        if d == 0:   # forward: h_f rows 0:H feed even column groups
            w_ih = w_ih.at[:, cols].set(w_ih_f[rows, :].T)
            w_hh = w_hh.at[0:H, cols].set(w_hh_f[rows, :].T)
            b_g = b_g.at[cols].set(b_ih_f[rows] + b_hh_f[rows])
        else:        # backward: h_b rows H:2H feed odd column groups
            w_ih = w_ih.at[:, cols].set(w_ih_b[rows, :].T)
            w_hh = w_hh.at[H:2 * H, cols].set(w_hh_b[rows, :].T)
            b_g = b_g.at[cols].set(b_ih_b[rows] + b_hh_b[rows])

    w_d = jnp.zeros((2 * H, LANE_OUT), jnp.float32).at[:, :NUM_CLASSES].set(w_dense.T)
    b_d = jnp.zeros((1, LANE_OUT), jnp.float32).at[0, :NUM_CLASSES].set(b_dense)
    return w_ih, w_hh, b_g.reshape(1, G), w_d, b_d


# ---------------- RoBERTa backbone stub (reference path only) --------------------
# TODO(synk): the RoBERTa transformer backbone is an external module passed into
# __init__ with no clean single-kernel Pallas equivalent here; it is replaced by a
# deterministic embedding-lookup stub producing (B, S, H) hidden states.  The
# stub's gather itself IS fused into the Pallas kernel above.
def roberta_stub(token_ids, attention_mask, emb_table):
    out = jnp.take(emb_table, token_ids, axis=0)                 # (B, S, H)
    return out * attention_mask[..., None].astype(jnp.float32)


# ---------------- full forward (hot path entirely in one Pallas kernel) ----------
@jax.jit
def lstm_add_forward(token_ids, attention_mask, emb_table, folded_params):
    emb3 = emb_table.reshape(VOCAB, 1, H)            # leading-axis lookup layout
    mask_f = attention_mask.astype(jnp.float32)
    logits_padded = lstm_head(token_ids, mask_f, emb3, folded_params)  # (B_PAD, 128)
    return logits_padded[:B, :NUM_CLASSES]                             # (B, 3)


# ---------------- reference (pure JAX, unfolded PyTorch-layout math) --------------
def reference_forward(token_ids, attention_mask, emb_table, raw):
    (w_ih_f, w_hh_f, b_ih_f, b_hh_f,
     w_ih_b, w_hh_b, b_ih_b, b_hh_b, w_dense, b_dense) = raw
    out = roberta_stub(token_ids, attention_mask, emb_table)     # (B, S, H)
    x_seq = jnp.transpose(out, (1, 0, 2))                        # (S, B, H)

    def sigm(z):
        return 1.0 / (1.0 + jnp.exp(-z))

    def run_dir(xs, w_ih, w_hh, b_ih, b_hh):
        h = jnp.zeros((B, H), jnp.float32)
        c = jnp.zeros((B, H), jnp.float32)
        for t in range(S):
            gates = xs[t] @ w_ih.T + b_ih + h @ w_hh.T + b_hh
            i = sigm(gates[:, 0:H])
            f = sigm(gates[:, H:2 * H])
            g = jnp.tanh(gates[:, 2 * H:3 * H])
            o = sigm(gates[:, 3 * H:4 * H])
            c = f * c + i * g
            h = o * jnp.tanh(c)
        return h

    h_f = run_dir(x_seq, w_ih_f, w_hh_f, b_ih_f, b_hh_f)         # last_hidden[0]
    h_b = run_dir(x_seq[::-1], w_ih_b, w_hh_b, b_ih_b, b_hh_b)   # last_hidden[1]
    hidden = jnp.concatenate([h_f, h_b], axis=1)                 # (B, 2H)
    return hidden @ w_dense.T + b_dense                          # (B, 3)


if __name__ == "__main__":
    key = jax.random.PRNGKey(0)
    k_tok, k_emb, k_par = jax.random.split(key, 3)

    token_ids = jax.random.randint(k_tok, (B, S), 0, VOCAB, dtype=jnp.int32)
    attention_mask = jnp.ones((B, S), jnp.int32)
    emb_table = jax.random.normal(k_emb, (VOCAB, H), jnp.float32) * 0.1

    raw_params = make_params(k_par)
    folded_params = fold_params(raw_params)      # offline algebraic folding

    logits = lstm_add_forward(token_ids, attention_mask, emb_table, folded_params)
    logits = jax.block_until_ready(logits)

    ref = reference_forward(token_ids, attention_mask, emb_table, raw_params)
    assert logits.shape == (B, NUM_CLASSES)
    assert jnp.allclose(logits, ref, atol=2e-4, rtol=2e-3), "mismatch vs reference"

    print("KERNEL_OK")
</pallas_src>

<mosaic_0001>
module attributes {stable_mosaic.version = 11 : i64} {
  func.func @lstm_head_kernel(%arg0: memref<2x8xi32, #tpu.memory_space<smem>>, %arg1: memref<2x8xf32, #tpu.memory_space<smem>>, %arg2: memref<64x1x32xf32, #tpu.memory_space<vmem>>, %arg3: memref<32x256xf32, #tpu.memory_space<vmem>>, %arg4: memref<64x256xf32, #tpu.memory_space<vmem>>, %arg5: memref<1x256xf32, #tpu.memory_space<vmem>>, %arg6: memref<64x128xf32, #tpu.memory_space<vmem>>, %arg7: memref<1x128xf32, #tpu.memory_space<vmem>>, %arg8: memref<8x128xf32, #tpu.memory_space<vmem>>, %arg9: memref<64x32xf32, #tpu.memory_space<vmem>>, %arg10: memref<64x256xf32, #tpu.memory_space<vmem>>) attributes {dimension_semantics = [], scalar_prefetch = 0 : i64, scratch_operands = 2 : i64, tpu.core_type = #tpu.core_type<tc>} {
    %cst = arith.constant 0.000000e+00 : f32
    %0 = vector.broadcast %cst : f32 to vector<64x32xf32>
    %c0 = arith.constant 0 : index
    %c0_0 = arith.constant 0 : index
    %1 = vector.load %arg9[%c0, %c0_0] : memref<64x32xf32, #tpu.memory_space<vmem>>, vector<64x32xf32>
    tpu.vector_store %arg9[%c0, %c0_0], %0 {strides = array<i32>} : memref<64x32xf32, #tpu.memory_space<vmem>>, vector<64x32xf32>,
    %c0_1 = arith.constant 0 : index
    %c0_2 = arith.constant 0 : index
    %2 = memref.load %arg0[%c0_1, %c0_2] : memref<2x8xi32, #tpu.memory_space<smem>>
    %c0_3 = arith.constant 0 : index
    %c0_4 = arith.constant 0 : index
    %3 = memref.load %arg1[%c0_3, %c0_4] : memref<2x8xf32, #tpu.memory_space<smem>>
    %4 = arith.index_cast %2 : i32 to index
    %c0_5 = arith.constant 0 : index
    %c0_6 = arith.constant 0 : index
    %5 = vector.load %arg2[%4, %c0_5, %c0_6] : memref<64x1x32xf32, #tpu.memory_space<vmem>>, vector<1x1x32xf32>
    %6 = vector.shape_cast %5 : vector<1x1x32xf32> to vector<1x32xf32>
    %7 = vector.broadcast %3 : f32 to vector<1x32xf32>
    %8 = arith.mulf %6, %7 : vector<1x32xf32>
    %c0_7 = arith.constant 0 : index
    %c0_8 = arith.constant 0 : index
    %9 = vector.load %arg9[%c0_7, %c0_8] : memref<64x32xf32, #tpu.memory_space<vmem>>, vector<1x32xf32>
    tpu.vector_store %arg9[%c0_7, %c0_8], %8 {strides = array<i32>} : memref<64x32xf32, #tpu.memory_space<vmem>>, vector<1x32xf32>,
    %c1 = arith.constant 1 : index
    %c0_9 = arith.constant 0 : index
    %10 = memref.load %arg0[%c1, %c0_9] : memref<2x8xi32, #tpu.memory_space<smem>>
    %c1_10 = arith.constant 1 : index
    %c0_11 = arith.constant 0 : index
    %11 = memref.load %arg1[%c1_10, %c0_11] : memref<2x8xf32, #tpu.memory_space<smem>>
    %12 = arith.index_cast %10 : i32 to index
    %c0_12 = arith.constant 0 : index
    %c0_13 = arith.constant 0 : index
    %13 = vector.load %arg2[%12, %c0_12, %c0_13] : memref<64x1x32xf32, #tpu.memory_space<vmem>>, vector<1x1x32xf32>
    %14 = vector.shape_cast %13 : vector<1x1x32xf32> to vector<1x32xf32>
    %15 = vector.broadcast %11 : f32 to vector<1x32xf32>
    %16 = arith.mulf %14, %15 : vector<1x32xf32>
    %c1_14 = arith.constant 1 : index
    %c0_15 = arith.constant 0 : index
    %17 = vector.load %arg9[%c1_14, %c0_15] : memref<64x32xf32, #tpu.memory_space<vmem>>, vector<1x32xf32>
    tpu.vector_store %arg9[%c1_14, %c0_15], %16 {strides = array<i32>} : memref<64x32xf32, #tpu.memory_space<vmem>>, vector<1x32xf32>,
    %c0_16 = arith.constant 0 : index
    %c1_17 = arith.constant 1 : index
    %18 = memref.load %arg0[%c0_16, %c1_17] : memref<2x8xi32, #tpu.memory_space<smem>>
    %c0_18 = arith.constant 0 : index
    %c1_19 = arith.constant 1 : index
    %19 = memref.load %arg1[%c0_18, %c1_19] : memref<2x8xf32, #tpu.memory_space<smem>>
    %20 = arith.index_cast %18 : i32 to index
    %c0_20 = arith.constant 0 : index
    %c0_21 = arith.constant 0 : index
    %21 = vector.load %arg2[%20, %c0_20, %c0_21] : memref<64x1x32xf32, #tpu.memory_space<vmem>>, vector<1x1x32xf32>
    %22 = vector.shape_cast %21 : vector<1x1x32xf32> to vector<1x32xf32>
    %23 = vector.broadcast %19 : f32 to vector<1x32xf32>
    %24 = arith.mulf %22, %23 : vector<1x32xf32>
    %c8 = arith.constant 8 : index
    %c0_22 = arith.constant 0 : index
    %25 = vector.load %arg9[%c8, %c0_22] : memref<64x32xf32, #tpu.memory_space<vmem>>, vector<1x32xf32>
    tpu.vector_store %arg9[%c8, %c0_22], %24 {strides = array<i32>} : memref<64x32xf32, #tpu.memory_space<vmem>>, vector<1x32xf32>,
    %c1_23 = arith.constant 1 : index
    %c1_24 = arith.constant 1 : index
    %26 = memref.load %arg0[%c1_23, %c1_24] : memref<2x8xi32, #tpu.memory_space<smem>>
    %c1_25 = arith.constant 1 : index
    %c1_26 = arith.constant 1 : index
    %27 = memref.load %arg1[%c1_25, %c1_26] : memref<2x8xf32, #tpu.memory_space<smem>>
    %28 = arith.index_cast %26 : i32 to index
    %c0_27 = arith.constant 0 : index
    %c0_28 = arith.constant 0 : index
    %29 = vector.load %arg2[%28, %c0_27, %c0_28] : memref<64x1x32xf32, #tpu.memory_space<vmem>>, vector<1x1x32xf32>
    %30 = vector.shape_cast %29 : vector<1x1x32xf32> to vector<1x32xf32>
    %31 = vector.broadcast %27 : f32 to vector<1x32xf32>
    %32 = arith.mulf %30, %31 : vector<1x32xf32>
    %c9 = arith.constant 9 : index
    %c0_29 = arith.constant 0 : index
    %33 = vector.load %arg9[%c9, %c0_29] : memref<64x32xf32, #tpu.memory_space<vmem>>, vector<1x32xf32>
    tpu.vector_store %arg9[%c9, %c0_29], %32 {strides = array<i32>} : memref<64x32xf32, #tpu.memory_space<vmem>>, vector<1x32xf32>,
    %c0_30 = arith.constant 0 : index
    %c2 = arith.constant 2 : index
    %34 = memref.load %arg0[%c0_30, %c2] : memref<2x8xi32, #tpu.memory_space<smem>>
    %c0_31 = arith.constant 0 : index
    %c2_32 = arith.constant 2 : index
    %35 = memref.load %arg1[%c0_31, %c2_32] : memref<2x8xf32, #tpu.memory_space<smem>>
    %36 = arith.index_cast %34 : i32 to index
    %c0_33 = arith.constant 0 : index
    %c0_34 = arith.constant 0 : index
    %37 = vector.load %arg2[%36, %c0_33, %c0_34] : memref<64x1x32xf32, #tpu.memory_space<vmem>>, vector<1x1x32xf32>
    %38 = vector.shape_cast %37 : vector<1x1x32xf32> to vector<1x32xf32>
    %39 = vector.broadcast %35 : f32 to vector<1x32xf32>
    %40 = arith.mulf %38, %39 : vector<1x32xf32>
    %c16 = arith.constant 16 : index
    %c0_35 = arith.constant 0 : index
    %41 = vector.load %arg9[%c16, %c0_35] : memref<64x32xf32, #tpu.memory_space<vmem>>, vector<1x32xf32>
    tpu.vector_store %arg9[%c16, %c0_35], %40 {strides = array<i32>} : memref<64x32xf32, #tpu.memory_space<vmem>>, vector<1x32xf32>,
    %c1_36 = arith.constant 1 : index
    %c2_37 = arith.constant 2 : index
    %42 = memref.load %arg0[%c1_36, %c2_37] : memref<2x8xi32, #tpu.memory_space<smem>>
    %c1_38 = arith.constant 1 : index
    %c2_39 = arith.constant 2 : index
    %43 = memref.load %arg1[%c1_38, %c2_39] : memref<2x8xf32, #tpu.memory_space<smem>>
    %44 = arith.index_cast %42 : i32 to index
    %c0_40 = arith.constant 0 : index
    %c0_41 = arith.constant 0 : index
    %45 = vector.load %arg2[%44, %c0_40, %c0_41] : memref<64x1x32xf32, #tpu.memory_space<vmem>>, vector<1x1x32xf32>
    %46 = vector.shape_cast %45 : vector<1x1x32xf32> to vector<1x32xf32>
    %47 = vector.broadcast %43 : f32 to vector<1x32xf32>
    %48 = arith.mulf %46, %47 : vector<1x32xf32>
    %c17 = arith.constant 17 : index
    %c0_42 = arith.constant 0 : index
    %49 = vector.load %arg9[%c17, %c0_42] : memref<64x32xf32, #tpu.memory_space<vmem>>, vector<1x32xf32>
    tpu.vector_store %arg9[%c17, %c0_42], %48 {strides = array<i32>} : memref<64x32xf32, #tpu.memory_space<vmem>>, vector<1x32xf32>,
    %c0_43 = arith.constant 0 : index
    %c3 = arith.constant 3 : index
    %50 = memref.load %arg0[%c0_43, %c3] : memref<2x8xi32, #tpu.memory_space<smem>>
    %c0_44 = arith.constant 0 : index
    %c3_45 = arith.constant 3 : index
    %51 = memref.load %arg1[%c0_44, %c3_45] : memref<2x8xf32, #tpu.memory_space<smem>>
    %52 = arith.index_cast %50 : i32 to index
    %c0_46 = arith.constant 0 : index
    %c0_47 = arith.constant 0 : index
    %53 = vector.load %arg2[%52, %c0_46, %c0_47] : memref<64x1x32xf32, #tpu.memory_space<vmem>>, vector<1x1x32xf32>
    %54 = vector.shape_cast %53 : vector<1x1x32xf32> to vector<1x32xf32>
    %55 = vector.broadcast %51 : f32 to vector<1x32xf32>
    %56 = arith.mulf %54, %55 : vector<1x32xf32>
    %c24 = arith.constant 24 : index
    %c0_48 = arith.constant 0 : index
    %57 = vector.load %arg9[%c24, %c0_48] : memref<64x32xf32, #tpu.memory_space<vmem>>, vector<1x32xf32>
    tpu.vector_store %arg9[%c24, %c0_48], %56 {strides = array<i32>} : memref<64x32xf32, #tpu.memory_space<vmem>>, vector<1x32xf32>,
    %c1_49 = arith.constant 1 : index
    %c3_50 = arith.constant 3 : index
    %58 = memref.load %arg0[%c1_49, %c3_50] : memref<2x8xi32, #tpu.memory_space<smem>>
    %c1_51 = arith.constant 1 : index
    %c3_52 = arith.constant 3 : index
    %59 = memref.load %arg1[%c1_51, %c3_52] : memref<2x8xf32, #tpu.memory_space<smem>>
    %60 = arith.index_cast %58 : i32 to index
    %c0_53 = arith.constant 0 : index
    %c0_54 = arith.constant 0 : index
    %61 = vector.load %arg2[%60, %c0_53, %c0_54] : memref<64x1x32xf32, #tpu.memory_space<vmem>>, vector<1x1x32xf32>
    %62 = vector.shape_cast %61 : vector<1x1x32xf32> to vector<1x32xf32>
    %63 = vector.broadcast %59 : f32 to vector<1x32xf32>
    %64 = arith.mulf %62, %63 : vector<1x32xf32>
    %c25 = arith.constant 25 : index
    %c0_55 = arith.constant 0 : index
    %65 = vector.load %arg9[%c25, %c0_55] : memref<64x32xf32, #tpu.memory_space<vmem>>, vector<1x32xf32>
    tpu.vector_store %arg9[%c25, %c0_55], %64 {strides = array<i32>} : memref<64x32xf32, #tpu.memory_space<vmem>>, vector<1x32xf32>,
    %c0_56 = arith.constant 0 : index
    %c4 = arith.constant 4 : index
    %66 = memref.load %arg0[%c0_56, %c4] : memref<2x8xi32, #tpu.memory_space<smem>>
    %c0_57 = arith.constant 0 : index
    %c4_58 = arith.constant 4 : index
    %67 = memref.load %arg1[%c0_57, %c4_58] : memref<2x8xf32, #tpu.memory_space<smem>>
    %68 = arith.index_cast %66 : i32 to index
    %c0_59 = arith.constant 0 : index
    %c0_60 = arith.constant 0 : index
    %69 = vector.load %arg2[%68, %c0_59, %c0_60] : memref<64x1x32xf32, #tpu.memory_space<vmem>>, vector<1x1x32xf32>
    %70 = vector.shape_cast %69 : vector<1x1x32xf32> to vector<1x32xf32>
    %71 = vector.broadcast %67 : f32 to vector<1x32xf32>
    %72 = arith.mulf %70, %71 : vector<1x32xf32>
    %c32 = arith.constant 32 : index
    %c0_61 = arith.constant 0 : index
    %73 = vector.load %arg9[%c32, %c0_61] : memref<64x32xf32, #tpu.memory_space<vmem>>, vector<1x32xf32>
    tpu.vector_store %arg9[%c32, %c0_61], %72 {strides = array<i32>} : memref<64x32xf32, #tpu.memory_space<vmem>>, vector<1x32xf32>,
    %c1_62 = arith.constant 1 : index
    %c4_63 = arith.constant 4 : index
    %74 = memref.load %arg0[%c1_62, %c4_63] : memref<2x8xi32, #tpu.memory_space<smem>>
    %c1_64 = arith.constant 1 : index
    %c4_65 = arith.constant 4 : index
    %75 = memref.load %arg1[%c1_64, %c4_65] : memref<2x8xf32, #tpu.memory_space<smem>>
    %76 = arith.index_cast %74 : i32 to index
    %c0_66 = arith.constant 0 : index
    %c0_67 = arith.constant 0 : index
    %77 = vector.load %arg2[%76, %c0_66, %c0_67] : memref<64x1x32xf32, #tpu.memory_space<vmem>>, vector<1x1x32xf32>
    %78 = vector.shape_cast %77 : vector<1x1x32xf32> to vector<1x32xf32>
    %79 = vector.broadcast %75 : f32 to vector<1x32xf32>
    %80 = arith.mulf %78, %79 : vector<1x32xf32>
    %c33 = arith.constant 33 : index
    %c0_68 = arith.constant 0 : index
    %81 = vector.load %arg9[%c33, %c0_68] : memref<64x32xf32, #tpu.memory_space<vmem>>, vector<1x32xf32>
    tpu.vector_store %arg9[%c33, %c0_68], %80 {strides = array<i32>} : memref<64x32xf32, #tpu.memory_space<vmem>>, vector<1x32xf32>,
    %c0_69 = arith.constant 0 : index
    %c5 = arith.constant 5 : index
    %82 = memref.load %arg0[%c0_69, %c5] : memref<2x8xi32, #tpu.memory_space<smem>>
    %c0_70 = arith.constant 0 : index
    %c5_71 = arith.constant 5 : index
    %83 = memref.load %arg1[%c0_70, %c5_71] : memref<2x8xf32, #tpu.memory_space<smem>>
    %84 = arith.index_cast %82 : i32 to index
    %c0_72 = arith.constant 0 : index
    %c0_73 = arith.constant 0 : index
    %85 = vector.load %arg2[%84, %c0_72, %c0_73] : memref<64x1x32xf32, #tpu.memory_space<vmem>>, vector<1x1x32xf32>
    %86 = vector.shape_cast %85 : vector<1x1x32xf32> to vector<1x32xf32>
    %87 = vector.broadcast %83 : f32 to vector<1x32xf32>
    %88 = arith.mulf %86, %87 : vector<1x32xf32>
    %c40 = arith.constant 40 : index
    %c0_74 = arith.constant 0 : index
    %89 = vector.load %arg9[%c40, %c0_74] : memref<64x32xf32, #tpu.memory_space<vmem>>, vector<1x32xf32>
    tpu.vector_store %arg9[%c40, %c0_74], %88 {strides = array<i32>} : memref<64x32xf32, #tpu.memory_space<vmem>>, vector<1x32xf32>,
    %c1_75 = arith.constant 1 : index
    %c5_76 = arith.constant 5 : index
    %90 = memref.load %arg0[%c1_75, %c5_76] : memref<2x8xi32, #tpu.memory_space<smem>>
    %c1_77 = arith.constant 1 : index
    %c5_78 = arith.constant 5 : index
    %91 = memref.load %arg1[%c1_77, %c5_78] : memref<2x8xf32, #tpu.memory_space<smem>>
    %92 = arith.index_cast %90 : i32 to index
    %c0_79 = arith.constant 0 : index
    %c0_80 = arith.constant 0 : index
    %93 = vector.load %arg2[%92, %c0_79, %c0_80] : memref<64x1x32xf32, #tpu.memory_space<vmem>>, vector<1x1x32xf32>
    %94 = vector.shape_cast %93 : vector<1x1x32xf32> to vector<1x32xf32>
    %95 = vector.broadcast %91 : f32 to vector<1x32xf32>
    %96 = arith.mulf %94, %95 : vector<1x32xf32>
    %c41 = arith.constant 41 : index
    %c0_81 = arith.constant 0 : index
    %97 = vector.load %arg9[%c41, %c0_81] : memref<64x32xf32, #tpu.memory_space<vmem>>, vector<1x32xf32>
    tpu.vector_store %arg9[%c41, %c0_81], %96 {strides = array<i32>} : memref<64x32xf32, #tpu.memory_space<vmem>>, vector<1x32xf32>,
    %c0_82 = arith.constant 0 : index
    %c6 = arith.constant 6 : index
    %98 = memref.load %arg0[%c0_82, %c6] : memref<2x8xi32, #tpu.memory_space<smem>>
    %c0_83 = arith.constant 0 : index
    %c6_84 = arith.constant 6 : index
    %99 = memref.load %arg1[%c0_83, %c6_84] : memref<2x8xf32, #tpu.memory_space<smem>>
    %100 = arith.index_cast %98 : i32 to index
    %c0_85 = arith.constant 0 : index
    %c0_86 = arith.constant 0 : index
    %101 = vector.load %arg2[%100, %c0_85, %c0_86] : memref<64x1x32xf32, #tpu.memory_space<vmem>>, vector<1x1x32xf32>
    %102 = vector.shape_cast %101 : vector<1x1x32xf32> to vector<1x32xf32>
    %103 = vector.broadcast %99 : f32 to vector<1x32xf32>
    %104 = arith.mulf %102, %103 : vector<1x32xf32>
    %c48 = arith.constant 48 : index
    %c0_87 = arith.constant 0 : index
    %105 = vector.load %arg9[%c48, %c0_87] : memref<64x32xf32, #tpu.memory_space<vmem>>, vector<1x32xf32>
    tpu.vector_store %arg9[%c48, %c0_87], %104 {strides = array<i32>} : memref<64x32xf32, #tpu.memory_space<vmem>>, vector<1x32xf32>,
    %c1_88 = arith.constant 1 : index
    %c6_89 = arith.constant 6 : index
    %106 = memref.load %arg0[%c1_88, %c6_89] : memref<2x8xi32, #tpu.memory_space<smem>>
    %c1_90 = arith.constant 1 : index
    %c6_91 = arith.constant 6 : index
    %107 = memref.load %arg1[%c1_90, %c6_91] : memref<2x8xf32, #tpu.memory_space<smem>>
    %108 = arith.index_cast %106 : i32 to index
    %c0_92 = arith.constant 0 : index
    %c0_93 = arith.constant 0 : index
    %109 = vector.load %arg2[%108, %c0_92, %c0_93] : memref<64x1x32xf32, #tpu.memory_space<vmem>>, vector<1x1x32xf32>
    %110 = vector.shape_cast %109 : vector<1x1x32xf32> to vector<1x32xf32>
    %111 = vector.broadcast %107 : f32 to vector<1x32xf32>
    %112 = arith.mulf %110, %111 : vector<1x32xf32>
    %c49 = arith.constant 49 : index
    %c0_94 = arith.constant 0 : index
    %113 = vector.load %arg9[%c49, %c0_94] : memref<64x32xf32, #tpu.memory_space<vmem>>, vector<1x32xf32>
    tpu.vector_store %arg9[%c49, %c0_94], %112 {strides = array<i32>} : memref<64x32xf32, #tpu.memory_space<vmem>>, vector<1x32xf32>,
    %c0_95 = arith.constant 0 : index
    %c7 = arith.constant 7 : index
    %114 = memref.load %arg0[%c0_95, %c7] : memref<2x8xi32, #tpu.memory_space<smem>>
    %c0_96 = arith.constant 0 : index
    %c7_97 = arith.constant 7 : index
    %115 = memref.load %arg1[%c0_96, %c7_97] : memref<2x8xf32, #tpu.memory_space<smem>>
    %116 = arith.index_cast %114 : i32 to index
    %c0_98 = arith.constant 0 : index
    %c0_99 = arith.constant 0 : index
    %117 = vector.load %arg2[%116, %c0_98, %c0_99] : memref<64x1x32xf32, #tpu.memory_space<vmem>>, vector<1x1x32xf32>
    %118 = vector.shape_cast %117 : vector<1x1x32xf32> to vector<1x32xf32>
    %119 = vector.broadcast %115 : f32 to vector<1x32xf32>
    %120 = arith.mulf %118, %119 : vector<1x32xf32>
    %c56 = arith.constant 56 : index
    %c0_100 = arith.constant 0 : index
    %121 = vector.load %arg9[%c56, %c0_100] : memref<64x32xf32, #tpu.memory_space<vmem>>, vector<1x32xf32>
    tpu.vector_store %arg9[%c56, %c0_100], %120 {strides = array<i32>} : memref<64x32xf32, #tpu.memory_space<vmem>>, vector<1x32xf32>,
    %c1_101 = arith.constant 1 : index
    %c7_102 = arith.constant 7 : index
    %122 = memref.load %arg0[%c1_101, %c7_102] : memref<2x8xi32, #tpu.memory_space<smem>>
    %c1_103 = arith.constant 1 : index
    %c7_104 = arith.constant 7 : index
    %123 = memref.load %arg1[%c1_103, %c7_104] : memref<2x8xf32, #tpu.memory_space<smem>>
    %124 = arith.index_cast %122 : i32 to index
    %c0_105 = arith.constant 0 : index
    %c0_106 = arith.constant 0 : index
    %125 = vector.load %arg2[%124, %c0_105, %c0_106] : memref<64x1x32xf32, #tpu.memory_space<vmem>>, vector<1x1x32xf32>
    %126 = vector.shape_cast %125 : vector<1x1x32xf32> to vector<1x32xf32>
    %127 = vector.broadcast %123 : f32 to vector<1x32xf32>
    %128 = arith.mulf %126, %127 : vector<1x32xf32>
    %c57 = arith.constant 57 : index
    %c0_107 = arith.constant 0 : index
    %129 = vector.load %arg9[%c57, %c0_107] : memref<64x32xf32, #tpu.memory_space<vmem>>, vector<1x32xf32>
    tpu.vector_store %arg9[%c57, %c0_107], %128 {strides = array<i32>} : memref<64x32xf32, #tpu.memory_space<vmem>>, vector<1x32xf32>,
    %c0_108 = arith.constant 0 : index
    %c0_109 = arith.constant 0 : index
    %130 = vector.load %arg9[%c0_108, %c0_109] : memref<64x32xf32, #tpu.memory_space<vmem>>, vector<64x32xf32>
    %c0_110 = arith.constant 0 : index
    %c0_111 = arith.constant 0 : index
    %131 = vector.load %arg3[%c0_110, %c0_111] : memref<32x256xf32, #tpu.memory_space<vmem>>, vector<32x256xf32>
    %cst_112 = arith.constant dense<0.000000e+00> : vector<64x256xf32>
    %132 = tpu.matmul %130, %131, %cst_112 {dimension_numbers = #tpu.dot_dimension_numbers<[1], [0], [0], [1], [0, 0, 1, 1], [], []>} : vector<64x32xf32>, vector<32x256xf32>, vector<64x256xf32> -> vector<64x256xf32>
    %c0_113 = arith.constant 0 : index
    %c0_114 = arith.constant 0 : index
    %133 = vector.load %arg5[%c0_113, %c0_114] : memref<1x256xf32, #tpu.memory_space<vmem>>, vector<1x256xf32>
    %134 = vector.broadcast %133 : vector<1x256xf32> to vector<64x256xf32>
    %135 = arith.addf %132, %134 : vector<64x256xf32>
    %c0_115 = arith.constant 0 : index
    %c0_116 = arith.constant 0 : index
    %136 = vector.load %arg10[%c0_115, %c0_116] : memref<64x256xf32, #tpu.memory_space<vmem>>, vector<64x256xf32>
    tpu.vector_store %arg10[%c0_115, %c0_116], %135 {strides = array<i32>} : memref<64x256xf32, #tpu.memory_space<vmem>>, vector<64x256xf32>,
    %137 = tpu.iota {dimensions = array<i32: 1>} : vector<8x256xi32>
    %c32_i32 = arith.constant 32 : i32
    %138 = vector.broadcast %c32_i32 : i32 to vector<8x256xi32>
    %139 = arith.andi %137, %138 : vector<8x256xi32>
    %c0_i32 = arith.constant 0 : i32
    %140 = vector.broadcast %c0_i32 : i32 to vector<8x256xi32>
    %141 = arith.cmpi eq, %139, %140 : vector<8x256xi32>
    %c0_117 = arith.constant 0 : index
    %c0_118 = arith.constant 0 : index
    %142 = vector.load %arg4[%c0_117, %c0_118] : memref<64x256xf32, #tpu.memory_space<vmem>>, vector<64x256xf32>
    %cst_119 = arith.constant 0.000000e+00 : f32
    %143 = vector.broadcast %cst_119 : f32 to vector<8x64xf32>
    %cst_120 = arith.constant 0.000000e+00 : f32
    %144 = vector.broadcast %cst_120 : f32 to vector<8x64xf32>
    %c0_121 = arith.constant 0 : index
    %c0_122 = arith.constant 0 : index
    %145 = vector.load %arg10[%c0_121, %c0_122] : memref<64x256xf32, #tpu.memory_space<vmem>>, vector<8x256xf32>
    %c56_123 = arith.constant 56 : index
    %c0_124 = arith.constant 0 : index
    %146 = vector.load %arg10[%c56_123, %c0_124] : memref<64x256xf32, #tpu.memory_space<vmem>>, vector<8x256xf32>
    %147 = arith.select %141, %145, %146 : vector<8x256xi1>, vector<8x256xf32>
    %cst_125 = arith.constant dense<0.000000e+00> : vector<8x256xf32>
    %148 = tpu.matmul %143, %142, %cst_125 {dimension_numbers = #tpu.dot_dimension_numbers<[1], [0], [0], [1], [0, 0, 1, 1], [], []>} : vector<8x64xf32>, vector<64x256xf32>, vector<8x256xf32> -> vector<8x256xf32>
    %149 = arith.addf %147, %148 : vector<8x256xf32>
    %150 = vector.extract_strided_slice %149 {offsets = [0, 0], sizes = [8, 192], strides = [1, 1]} : vector<8x256xf32> to vector<8x192xf32>
    %cst_126 = arith.constant 5.000000e-01 : f32
    %151 = vector.broadcast %cst_126 : f32 to vector<8x192xf32>
    %152 = arith.mulf %151, %150 : vector<8x192xf32>
    %153 = math.tanh %152 : vector<8x192xf32>
    %cst_127 = arith.constant 1.000000e+00 : f32
    %154 = vector.broadcast %cst_127 : f32 to vector<8x192xf32>
    %155 = arith.addf %153, %154 : vector<8x192xf32>
    %cst_128 = arith.constant 5.000000e-01 : f32
    %156 = vector.broadcast %cst_128 : f32 to vector<8x192xf32>
    %157 = arith.mulf %156, %155 : vector<8x192xf32>
    %158 = vector.extract_strided_slice %149 {offsets = [0, 192], sizes = [8, 64], strides = [1, 1]} : vector<8x256xf32> to vector<8x64xf32>
    %159 = math.tanh %158 : vector<8x64xf32>
    %160 = vector.extract_strided_slice %157 {offsets = [0, 0], sizes = [8, 64], strides = [1, 1]} : vector<8x192xf32> to vector<8x64xf32>
    %161 = vector.extract_strided_slice %157 {offsets = [0, 64], sizes = [8, 64], strides = [1, 1]} : vector<8x192xf32> to vector<8x64xf32>
    %162 = vector.extract_strided_slice %157 {offsets = [0, 128], sizes = [8, 64], strides = [1, 1]} : vector<8x192xf32> to vector<8x64xf32>
    %163 = arith.mulf %161, %144 : vector<8x64xf32>
    %164 = arith.mulf %160, %159 : vector<8x64xf32>
    %165 = arith.addf %163, %164 : vector<8x64xf32>
    %166 = math.tanh %165 : vector<8x64xf32>
    %167 = arith.mulf %162, %166 : vector<8x64xf32>
    %c8_129 = arith.constant 8 : index
    %c0_130 = arith.constant 0 : index
    %168 = vector.load %arg10[%c8_129, %c0_130] : memref<64x256xf32, #tpu.memory_space<vmem>>, vector<8x256xf32>
    %c48_131 = arith.constant 48 : index
    %c0_132 = arith.constant 0 : index
    %169 = vector.load %arg10[%c48_131, %c0_132] : memref<64x256xf32, #tpu.memory_space<vmem>>, vector<8x256xf32>
    %170 = arith.select %141, %168, %169 : vector<8x256xi1>, vector<8x256xf32>
    %cst_133 = arith.constant dense<0.000000e+00> : vector<8x256xf32>
    %171 = tpu.matmul %167, %142, %cst_133 {dimension_numbers = #tpu.dot_dimension_numbers<[1], [0], [0], [1], [0, 0, 1, 1], [], []>} : vector<8x64xf32>, vector<64x256xf32>, vector<8x256xf32> -> vector<8x256xf32>
    %172 = arith.addf %170, %171 : vector<8x256xf32>
    %173 = vector.extract_strided_slice %172 {offsets = [0, 0], sizes = [8, 192], strides = [1, 1]} : vector<8x256xf32> to vector<8x192xf32>
    %cst_134 = arith.constant 5.000000e-01 : f32
    %174 = vector.broadcast %cst_134 : f32 to vector<8x192xf32>
    %175 = arith.mulf %174, %173 : vector<8x192xf32>
    %176 = math.tanh %175 : vector<8x192xf32>
    %cst_135 = arith.constant 1.000000e+00 : f32
    %177 = vector.broadcast %cst_135 : f32 to vector<8x192xf32>
    %178 = arith.addf %176, %177 : vector<8x192xf32>
    %cst_136 = arith.constant 5.000000e-01 : f32
    %179 = vector.broadcast %cst_136 : f32 to vector<8x192xf32>
    %180 = arith.mulf %179, %178 : vector<8x192xf32>
    %181 = vector.extract_strided_slice %172 {offsets = [0, 192], sizes = [8, 64], strides = [1, 1]} : vector<8x256xf32> to vector<8x64xf32>
    %182 = math.tanh %181 : vector<8x64xf32>
    %183 = vector.extract_strided_slice %180 {offsets = [0, 0], sizes = [8, 64], strides = [1, 1]} : vector<8x192xf32> to vector<8x64xf32>
    %184 = vector.extract_strided_slice %180 {offsets = [0, 64], sizes = [8, 64], strides = [1, 1]} : vector<8x192xf32> to vector<8x64xf32>
    %185 = vector.extract_strided_slice %180 {offsets = [0, 128], sizes = [8, 64], strides = [1, 1]} : vector<8x192xf32> to vector<8x64xf32>
    %186 = arith.mulf %184, %165 : vector<8x64xf32>
    %187 = arith.mulf %183, %182 : vector<8x64xf32>
    %188 = arith.addf %186, %187 : vector<8x64xf32>
    %189 = math.tanh %188 : vector<8x64xf32>
    %190 = arith.mulf %185, %189 : vector<8x64xf32>
    %c16_137 = arith.constant 16 : index
    %c0_138 = arith.constant 0 : index
    %191 = vector.load %arg10[%c16_137, %c0_138] : memref<64x256xf32, #tpu.memory_space<vmem>>, vector<8x256xf32>
    %c40_139 = arith.constant 40 : index
    %c0_140 = arith.constant 0 : index
    %192 = vector.load %arg10[%c40_139, %c0_140] : memref<64x256xf32, #tpu.memory_space<vmem>>, vector<8x256xf32>
    %193 = arith.select %141, %191, %192 : vector<8x256xi1>, vector<8x256xf32>
    %cst_141 = arith.constant dense<0.000000e+00> : vector<8x256xf32>
    %194 = tpu.matmul %190, %142, %cst_141 {dimension_numbers = #tpu.dot_dimension_numbers<[1], [0], [0], [1], [0, 0, 1, 1], [], []>} : vector<8x64xf32>, vector<64x256xf32>, vector<8x256xf32> -> vector<8x256xf32>
    %195 = arith.addf %193, %194 : vector<8x256xf32>
    %196 = vector.extract_strided_slice %195 {offsets = [0, 0], sizes = [8, 192], strides = [1, 1]} : vector<8x256xf32> to vector<8x192xf32>
    %cst_142 = arith.constant 5.000000e-01 : f32
    %197 = vector.broadcast %cst_142 : f32 to vector<8x192xf32>
    %198 = arith.mulf %197, %196 : vector<8x192xf32>
    %199 = math.tanh %198 : vector<8x192xf32>
    %cst_143 = arith.constant 1.000000e+00 : f32
    %200 = vector.broadcast %cst_143 : f32 to vector<8x192xf32>
    %201 = arith.addf %199, %200 : vector<8x192xf32>
    %cst_144 = arith.constant 5.000000e-01 : f32
    %202 = vector.broadcast %cst_144 : f32 to vector<8x192xf32>
    %203 = arith.mulf %202, %201 : vector<8x192xf32>
    %204 = vector.extract_strided_slice %195 {offsets = [0, 192], sizes = [8, 64], strides = [1, 1]} : vector<8x256xf32> to vector<8x64xf32>
    %205 = math.tanh %204 : vector<8x64xf32>
    %206 = vector.extract_strided_slice %203 {offsets = [0, 0], sizes = [8, 64], strides = [1, 1]} : vector<8x192xf32> to vector<8x64xf32>
    %207 = vector.extract_strided_slice %203 {offsets = [0, 64], sizes = [8, 64], strides = [1, 1]} : vector<8x192xf32> to vector<8x64xf32>
    %208 = vector.extract_strided_slice %203 {offsets = [0, 128], sizes = [8, 64], strides = [1, 1]} : vector<8x192xf32> to vector<8x64xf32>
    %209 = arith.mulf %207, %188 : vector<8x64xf32>
    %210 = arith.mulf %206, %205 : vector<8x64xf32>
    %211 = arith.addf %209, %210 : vector<8x64xf32>
    %212 = math.tanh %211 : vector<8x64xf32>
    %213 = arith.mulf %208, %212 : vector<8x64xf32>
    %c24_145 = arith.constant 24 : index
    %c0_146 = arith.constant 0 : index
    %214 = vector.load %arg10[%c24_145, %c0_146] : memref<64x256xf32, #tpu.memory_space<vmem>>, vector<8x256xf32>
    %c32_147 = arith.constant 32 : index
    %c0_148 = arith.constant 0 : index
    %215 = vector.load %arg10[%c32_147, %c0_148] : memref<64x256xf32, #tpu.memory_space<vmem>>, vector<8x256xf32>
    %216 = arith.select %141, %214, %215 : vector<8x256xi1>, vector<8x256xf32>
    %cst_149 = arith.constant dense<0.000000e+00> : vector<8x256xf32>
    %217 = tpu.matmul %213, %142, %cst_149 {dimension_numbers = #tpu.dot_dimension_numbers<[1], [0], [0], [1], [0, 0, 1, 1], [], []>} : vector<8x64xf32>, vector<64x256xf32>, vector<8x256xf32> -> vector<8x256xf32>
    %218 = arith.addf %216, %217 : vector<8x256xf32>
    %219 = vector.extract_strided_slice %218 {offsets = [0, 0], sizes = [8, 192], strides = [1, 1]} : vector<8x256xf32> to vector<8x192xf32>
    %cst_150 = arith.constant 5.000000e-01 : f32
    %220 = vector.broadcast %cst_150 : f32 to vector<8x192xf32>
    %221 = arith.mulf %220, %219 : vector<8x192xf32>
    %222 = math.tanh %221 : vector<8x192xf32>
    %cst_151 = arith.constant 1.000000e+00 : f32
    %223 = vector.broadcast %cst_151 : f32 to vector<8x192xf32>
    %224 = arith.addf %222, %223 : vector<8x192xf32>
    %cst_152 = arith.constant 5.000000e-01 : f32
    %225 = vector.broadcast %cst_152 : f32 to vector<8x192xf32>
    %226 = arith.mulf %225, %224 : vector<8x192xf32>
    %227 = vector.extract_strided_slice %218 {offsets = [0, 192], sizes = [8, 64], strides = [1, 1]} : vector<8x256xf32> to vector<8x64xf32>
    %228 = math.tanh %227 : vector<8x64xf32>
    %229 = vector.extract_strided_slice %226 {offsets = [0, 0], sizes = [8, 64], strides = [1, 1]} : vector<8x192xf32> to vector<8x64xf32>
    %230 = vector.extract_strided_slice %226 {offsets = [0, 64], sizes = [8, 64], strides = [1, 1]} : vector<8x192xf32> to vector<8x64xf32>
    %231 = vector.extract_strided_slice %226 {offsets = [0, 128], sizes = [8, 64], strides = [1, 1]} : vector<8x192xf32> to vector<8x64xf32>
    %232 = arith.mulf %230, %211 : vector<8x64xf32>
    %233 = arith.mulf %229, %228 : vector<8x64xf32>
    %234 = arith.addf %232, %233 : vector<8x64xf32>
    %235 = math.tanh %234 : vector<8x64xf32>
    %236 = arith.mulf %231, %235 : vector<8x64xf32>
    %c32_153 = arith.constant 32 : index
    %c0_154 = arith.constant 0 : index
    %237 = vector.load %arg10[%c32_153, %c0_154] : memref<64x256xf32, #tpu.memory_space<vmem>>, vector<8x256xf32>
    %c24_155 = arith.constant 24 : index
    %c0_156 = arith.constant 0 : index
    %238 = vector.load %arg10[%c24_155, %c0_156] : memref<64x256xf32, #tpu.memory_space<vmem>>, vector<8x256xf32>
    %239 = arith.select %141, %237, %238 : vector<8x256xi1>, vector<8x256xf32>
    %cst_157 = arith.constant dense<0.000000e+00> : vector<8x256xf32>
    %240 = tpu.matmul %236, %142, %cst_157 {dimension_numbers = #tpu.dot_dimension_numbers<[1], [0], [0], [1], [0, 0, 1, 1], [], []>} : vector<8x64xf32>, vector<64x256xf32>, vector<8x256xf32> -> vector<8x256xf32>
    %241 = arith.addf %239, %240 : vector<8x256xf32>
    %242 = vector.extract_strided_slice %241 {offsets = [0, 0], sizes = [8, 192], strides = [1, 1]} : vector<8x256xf32> to vector<8x192xf32>
    %cst_158 = arith.constant 5.000000e-01 : f32
    %243 = vector.broadcast %cst_158 : f32 to vector<8x192xf32>
    %244 = arith.mulf %243, %242 : vector<8x192xf32>
    %245 = math.tanh %244 : vector<8x192xf32>
    %cst_159 = arith.constant 1.000000e+00 : f32
    %246 = vector.broadcast %cst_159 : f32 to vector<8x192xf32>
    %247 = arith.addf %245, %246 : vector<8x192xf32>
    %cst_160 = arith.constant 5.000000e-01 : f32
    %248 = vector.broadcast %cst_160 : f32 to vector<8x192xf32>
    %249 = arith.mulf %248, %247 : vector<8x192xf32>
    %250 = vector.extract_strided_slice %241 {offsets = [0, 192], sizes = [8, 64], strides = [1, 1]} : vector<8x256xf32> to vector<8x64xf32>
    %251 = math.tanh %250 : vector<8x64xf32>
    %252 = vector.extract_strided_slice %249 {offsets = [0, 0], sizes = [8, 64], strides = [1, 1]} : vector<8x192xf32> to vector<8x64xf32>
    %253 = vector.extract_strided_slice %249 {offsets = [0, 64], sizes = [8, 64], strides = [1, 1]} : vector<8x192xf32> to vector<8x64xf32>
    %254 = vector.extract_strided_slice %249 {offsets = [0, 128], sizes = [8, 64], strides = [1, 1]} : vector<8x192xf32> to vector<8x64xf32>
    %255 = arith.mulf %253, %234 : vector<8x64xf32>
    %256 = arith.mulf %252, %251 : vector<8x64xf32>
    %257 = arith.addf %255, %256 : vector<8x64xf32>
    %258 = math.tanh %257 : vector<8x64xf32>
    %259 = arith.mulf %254, %258 : vector<8x64xf32>
    %c40_161 = arith.constant 40 : index
    %c0_162 = arith.constant 0 : index
    %260 = vector.load %arg10[%c40_161, %c0_162] : memref<64x256xf32, #tpu.memory_space<vmem>>, vector<8x256xf32>
    %c16_163 = arith.constant 16 : index
    %c0_164 = arith.constant 0 : index
    %261 = vector.load %arg10[%c16_163, %c0_164] : memref<64x256xf32, #tpu.memory_space<vmem>>, vector<8x256xf32>
    %262 = arith.select %141, %260, %261 : vector<8x256xi1>, vector<8x256xf32>
    %cst_165 = arith.constant dense<0.000000e+00> : vector<8x256xf32>
    %263 = tpu.matmul %259, %142, %cst_165 {dimension_numbers = #tpu.dot_dimension_numbers<[1], [0], [0], [1], [0, 0, 1, 1], [], []>} : vector<8x64xf32>, vector<64x256xf32>, vector<8x256xf32> -> vector<8x256xf32>
    %264 = arith.addf %262, %263 : vector<8x256xf32>
    %265 = vector.extract_strided_slice %264 {offsets = [0, 0], sizes = [8, 192], strides = [1, 1]} : vector<8x256xf32> to vector<8x192xf32>
    %cst_166 = arith.constant 5.000000e-01 : f32
    %266 = vector.broadcast %cst_166 : f32 to vector<8x192xf32>
    %267 = arith.mulf %266, %265 : vector<8x192xf32>
    %268 = math.tanh %267 : vector<8x192xf32>
    %cst_167 = arith.constant 1.000000e+00 : f32
    %269 = vector.broadcast %cst_167 : f32 to vector<8x192xf32>
    %270 = arith.addf %268, %269 : vector<8x192xf32>
    %cst_168 = arith.constant 5.000000e-01 : f32
    %271 = vector.broadcast %cst_168 : f32 to vector<8x192xf32>
    %272 = arith.mulf %271, %270 : vector<8x192xf32>
    %273 = vector.extract_strided_slice %264 {offsets = [0, 192], sizes = [8, 64], strides = [1, 1]} : vector<8x256xf32> to vector<8x64xf32>
    %274 = math.tanh %273 : vector<8x64xf32>
    %275 = vector.extract_strided_slice %272 {offsets = [0, 0], sizes = [8, 64], strides = [1, 1]} : vector<8x192xf32> to vector<8x64xf32>
    %276 = vector.extract_strided_slice %272 {offsets = [0, 64], sizes = [8, 64], strides = [1, 1]} : vector<8x192xf32> to vector<8x64xf32>
    %277 = vector.extract_strided_slice %272 {offsets = [0, 128], sizes = [8, 64], strides = [1, 1]} : vector<8x192xf32> to vector<8x64xf32>
    %278 = arith.mulf %276, %257 : vector<8x64xf32>
    %279 = arith.mulf %275, %274 : vector<8x64xf32>
    %280 = arith.addf %278, %279 : vector<8x64xf32>
    %281 = math.tanh %280 : vector<8x64xf32>
    %282 = arith.mulf %277, %281 : vector<8x64xf32>
    %c48_169 = arith.constant 48 : index
    %c0_170 = arith.constant 0 : index
    %283 = vector.load %arg10[%c48_169, %c0_170] : memref<64x256xf32, #tpu.memory_space<vmem>>, vector<8x256xf32>
    %c8_171 = arith.constant 8 : index
    %c0_172 = arith.constant 0 : index
    %284 = vector.load %arg10[%c8_171, %c0_172] : memref<64x256xf32, #tpu.memory_space<vmem>>, vector<8x256xf32>
    %285 = arith.select %141, %283, %284 : vector<8x256xi1>, vector<8x256xf32>
    %cst_173 = arith.constant dense<0.000000e+00> : vector<8x256xf32>
    %286 = tpu.matmul %282, %142, %cst_173 {dimension_numbers = #tpu.dot_dimension_numbers<[1], [0], [0], [1], [0, 0, 1, 1], [], []>} : vector<8x64xf32>, vector<64x256xf32>, vector<8x256xf32> -> vector<8x256xf32>
    %287 = arith.addf %285, %286 : vector<8x256xf32>
    %288 = vector.extract_strided_slice %287 {offsets = [0, 0], sizes = [8, 192], strides = [1, 1]} : vector<8x256xf32> to vector<8x192xf32>
    %cst_174 = arith.constant 5.000000e-01 : f32
    %289 = vector.broadcast %cst_174 : f32 to vector<8x192xf32>
    %290 = arith.mulf %289, %288 : vector<8x192xf32>
    %291 = math.tanh %290 : vector<8x192xf32>
    %cst_175 = arith.constant 1.000000e+00 : f32
    %292 = vector.broadcast %cst_175 : f32 to vector<8x192xf32>
    %293 = arith.addf %291, %292 : vector<8x192xf32>
    %cst_176 = arith.constant 5.000000e-01 : f32
    %294 = vector.broadcast %cst_176 : f32 to vector<8x192xf32>
    %295 = arith.mulf %294, %293 : vector<8x192xf32>
    %296 = vector.extract_strided_slice %287 {offsets = [0, 192], sizes = [8, 64], strides = [1, 1]} : vector<8x256xf32> to vector<8x64xf32>
    %297 = math.tanh %296 : vector<8x64xf32>
    %298 = vector.extract_strided_slice %295 {offsets = [0, 0], sizes = [8, 64], strides = [1, 1]} : vector<8x192xf32> to vector<8x64xf32>
    %299 = vector.extract_strided_slice %295 {offsets = [0, 64], sizes = [8, 64], strides = [1, 1]} : vector<8x192xf32> to vector<8x64xf32>
    %300 = vector.extract_strided_slice %295 {offsets = [0, 128], sizes = [8, 64], strides = [1, 1]} : vector<8x192xf32> to vector<8x64xf32>
    %301 = arith.mulf %299, %280 : vector<8x64xf32>
    %302 = arith.mulf %298, %297 : vector<8x64xf32>
    %303 = arith.addf %301, %302 : vector<8x64xf32>
    %304 = math.tanh %303 : vector<8x64xf32>
    %305 = arith.mulf %300, %304 : vector<8x64xf32>
    %c56_177 = arith.constant 56 : index
    %c0_178 = arith.constant 0 : index
    %306 = vector.load %arg10[%c56_177, %c0_178] : memref<64x256xf32, #tpu.memory_space<vmem>>, vector<8x256xf32>
    %c0_179 = arith.constant 0 : index
    %c0_180 = arith.constant 0 : index
    %307 = vector.load %arg10[%c0_179, %c0_180] : memref<64x256xf32, #tpu.memory_space<vmem>>, vector<8x256xf32>
    %308 = arith.select %141, %306, %307 : vector<8x256xi1>, vector<8x256xf32>
    %cst_181 = arith.constant dense<0.000000e+00> : vector<8x256xf32>
    %309 = tpu.matmul %305, %142, %cst_181 {dimension_numbers = #tpu.dot_dimension_numbers<[1], [0], [0], [1], [0, 0, 1, 1], [], []>} : vector<8x64xf32>, vector<64x256xf32>, vector<8x256xf32> -> vector<8x256xf32>
    %310 = arith.addf %308, %309 : vector<8x256xf32>
    %311 = vector.extract_strided_slice %310 {offsets = [0, 0], sizes = [8, 192], strides = [1, 1]} : vector<8x256xf32> to vector<8x192xf32>
    %cst_182 = arith.constant 5.000000e-01 : f32
    %312 = vector.broadcast %cst_182 : f32 to vector<8x192xf32>
    %313 = arith.mulf %312, %311 : vector<8x192xf32>
    %314 = math.tanh %313 : vector<8x192xf32>
    %cst_183 = arith.constant 1.000000e+00 : f32
    %315 = vector.broadcast %cst_183 : f32 to vector<8x192xf32>
    %316 = arith.addf %314, %315 : vector<8x192xf32>
    %cst_184 = arith.constant 5.000000e-01 : f32
    %317 = vector.broadcast %cst_184 : f32 to vector<8x192xf32>
    %318 = arith.mulf %317, %316 : vector<8x192xf32>
    %319 = vector.extract_strided_slice %310 {offsets = [0, 192], sizes = [8, 64], strides = [1, 1]} : vector<8x256xf32> to vector<8x64xf32>
    %320 = math.tanh %319 : vector<8x64xf32>
    %321 = vector.extract_strided_slice %318 {offsets = [0, 0], sizes = [8, 64], strides = [1, 1]} : vector<8x192xf32> to vector<8x64xf32>
    %322 = vector.extract_strided_slice %318 {offsets = [0, 64], sizes = [8, 64], strides = [1, 1]} : vector<8x192xf32> to vector<8x64xf32>
    %323 = vector.extract_strided_slice %318 {offsets = [0, 128], sizes = [8, 64], strides = [1, 1]} : vector<8x192xf32> to vector<8x64xf32>
    %324 = arith.mulf %322, %303 : vector<8x64xf32>
    %325 = arith.mulf %321, %320 : vector<8x64xf32>
    %326 = arith.addf %324, %325 : vector<8x64xf32>
    %327 = math.tanh %326 : vector<8x64xf32>
    %328 = arith.mulf %323, %327 : vector<8x64xf32>
    %c0_185 = arith.constant 0 : index
    %c0_186 = arith.constant 0 : index
    %329 = vector.load %arg6[%c0_185, %c0_186] : memref<64x128xf32, #tpu.memory_space<vmem>>, vector<64x128xf32>
    %cst_187 = arith.constant dense<0.000000e+00> : vector<8x128xf32>
    %330 = tpu.matmul %328, %329, %cst_187 {dimension_numbers = #tpu.dot_dimension_numbers<[1], [0], [0], [1], [0, 0, 1, 1], [], []>} : vector<8x64xf32>, vector<64x128xf32>, vector<8x128xf32> -> vector<8x128xf32>
    %c0_188 = arith.constant 0 : index
    %c0_189 = arith.constant 0 : index
    %331 = vector.load %arg7[%c0_188, %c0_189] : memref<1x128xf32, #tpu.memory_space<vmem>>, vector<1x128xf32>
    %332 = vector.broadcast %331 : vector<1x128xf32> to vector<8x128xf32>
    %333 = arith.addf %330, %332 : vector<8x128xf32>
    %c0_190 = arith.constant 0 : index
    %c0_191 = arith.constant 0 : index
    %334 = vector.load %arg8[%c0_190, %c0_191] : memref<8x128xf32, #tpu.memory_space<vmem>>, vector<8x128xf32>
    tpu.vector_store %arg8[%c0_190, %c0_191], %333 {strides = array<i32>} : memref<8x128xf32, #tpu.memory_space<vmem>>, vector<8x128xf32>,
    return
  }
}

</mosaic_0001>

<llo_original>
// kernel: lstm_add_forward.1
$region0: #{lstm_add_forward.1}
  #allocation0 [shape = 'u32[]', space=smem, size = 0x4, offset = 0x4, fixed_abs, tag = 'smem constant byte address 0x4 - core index']
  #allocation1 [shape = 'u32[144,128]{1,0:T(1,128)}', space=vmem, size = 0x12000, scoped, tag = 'internal scratch']
  #allocation2 [shape = 'f32[64,32]{1,0:T(8,128)}', space=vmem, size = 0x8000, scoped, tag = 'scratch operand']
  #allocation3 [shape = 'f32[64,256]{1,0:T(8,128)}', space=vmem, size = 0x10000, scoped, tag = 'scratch operand']
  %s0 = inlined_call_operand.vmem [shape: s32[2,8], index: 0, kind: input, shape index: {}]
  %s1 = inlined_call_operand.vmem [shape: f32[2,8], index: 1, kind: input, shape index: {}]
  %s2 = inlined_call_operand.vmem [shape: f32[64,1,32], index: 2, kind: input, shape index: {}]
  %s3 = inlined_call_operand.vmem [shape: f32[32,256], index: 3, kind: input, shape index: {}]
  %s4 = inlined_call_operand.hbm [shape: f32[64,256], index: 4, kind: input, shape index: {}]
  %s5 = inlined_call_operand.vmem [shape: f32[1,256], index: 5, kind: input, shape index: {}]
  %s6 = inlined_call_operand.hbm [shape: f32[64,128], index: 6, kind: input, shape index: {}]
  %s7 = inlined_call_operand.vmem [shape: f32[1,128], index: 7, kind: input, shape index: {}]
  %s8 = inlined_call_operand.vmem [shape: f32[8,128], index: 8, kind: output, shape index: {}]
  %s9 = sld [smem:[#allocation0]]
  $region58: #{lstm_add_forward.1} parent=0
    _
  %s11 = ssub.s32 1, %s9
  %s12 = scalar_select 0, %s11, %s9
  $region1: #{lstm_add_forward.1} parent=0
    #allocation4 [shape = 'u8[1024]{0}', space=smem, size = 0x400, scoped, tag = 'input window, operand 0, single buffered']
    #allocation5 [shape = 's32[1]{0}', space=sflag, size = 0x4, scoped, tag = 'scoped memory for lstm_add_forward.1']
    #allocation6 [shape = 's32[1]{0}', space=sflag, size = 0x4, scoped, tag = 'scoped memory for lstm_add_forward.1']
    #allocation7 [shape = 'u8[1024]{0}', space=smem, size = 0x400, scoped, tag = 'input window, operand 1, single buffered']
    #allocation8 [shape = 's32[1]{0}', space=sflag, size = 0x4, scoped, tag = 'scoped memory for lstm_add_forward.1']
    #allocation9 [shape = 'u8[65536]{0}', space=vmem, size = 0x10000, scoped, tag = 'input window, operand 4, single buffered']
    #allocation10 [shape = 'u8[32768]{0}', space=vmem, size = 0x8000, scoped, tag = 'input window, operand 6, single buffered']
    #allocation11 [shape = 's32[1]{0}', space=sflag, size = 0x4, scoped, tag = 'scoped memory for lstm_add_forward.1']
    %13 = vsyncpa [#allocation6], 0
    %14 = vsyncpa [#allocation8], 0
    %15 = vsyncpa [#allocation5], 0
    %16 = vsyncpa [#allocation11], 0
    // Predicated region
    $region2: #{lstm_add_forward.1} parent=1 // pred_check
      _
    $region3: #{lstm_add_forward.1} parent=1 // pred_check_branch
      %18 = sbr.rel (0) target = $region5
    $region4: #{lstm_add_forward.1} parent=1 // pred_region
      %s20 = ssub.s32 32, 32
      %21 = vsyncadd [#allocation6], %s20
      %s23 = sshll.u32 %s0, 4
      %s24 = int_to_ptr.vmem [resolvable:$true] %s23
      %26 = dma.vmem_to_smem %s24, 32, [#allocation4], [#allocation6]
    $region5: #{lstm_add_forward.1} parent=1 // pred_fallthru
      _
    // Predicated region
    $region6: #{lstm_add_forward.1} parent=1 // pred_check
      _
    $region7: #{lstm_add_forward.1} parent=1 // pred_check_branch
      %28 = sbr.rel (0) target = $region9
    $region8: #{lstm_add_forward.1} parent=1 // pred_region
      %s30 = ssub.s32 32, 32
      %31 = vsyncadd [#allocation8], %s30
      %s33 = sshll.u32 %s1, 4
      %s34 = int_to_ptr.vmem [resolvable:$true] %s33
      %36 = dma.vmem_to_smem %s34, 32, [#allocation7], [#allocation8]
    $region9: #{lstm_add_forward.1} parent=1 // pred_fallthru
      _
    // Predicated region
    $region10: #{lstm_add_forward.1} parent=1 // pred_check
      _
    $region11: #{lstm_add_forward.1} parent=1 // pred_check_branch
      %38 = sbr.rel (0) target = $region13
    $region12: #{lstm_add_forward.1} parent=1 // pred_region
      _
    $region13: #{lstm_add_forward.1} parent=1 // pred_fallthru
      _
    // Predicated region
    $region14: #{lstm_add_forward.1} parent=1 // pred_check
      _
    $region15: #{lstm_add_forward.1} parent=1 // pred_check_branch
      %40 = sbr.rel (0) target = $region17
    $region16: #{lstm_add_forward.1} parent=1 // pred_region
      _
    $region17: #{lstm_add_forward.1} parent=1 // pred_fallthru
      _
    // Predicated region
    $region18: #{lstm_add_forward.1} parent=1 // pred_check
      _
    $region19: #{lstm_add_forward.1} parent=1 // pred_check_branch
      %42 = sbr.rel (0) target = $region21
    $region20: #{lstm_add_forward.1} parent=1 // pred_region
      %s44 = ssub.s32 2048, 2048
      %45 = vsyncadd [#allocation5], %s44
      %s46 = sshll.u32 [#allocation9], 4
      %s47 = int_to_ptr.vmem [resolvable:$true] %s46
      %52 = dma.hbm_to_vmem [thread:$0]  %s4, 2048, %s47, [#allocation5], 256, 256, 16
    $region21: #{lstm_add_forward.1} parent=1 // pred_fallthru
      _
    // Predicated region
    $region22: #{lstm_add_forward.1} parent=1 // pred_check
      _
    $region23: #{lstm_add_forward.1} parent=1 // pred_check_branch
      %54 = sbr.rel (0) target = $region25
    $region24: #{lstm_add_forward.1} parent=1 // pred_region
      _
    $region25: #{lstm_add_forward.1} parent=1 // pred_fallthru
      _
    // Predicated region
    $region26: #{lstm_add_forward.1} parent=1 // pred_check
      _
    $region27: #{lstm_add_forward.1} parent=1 // pred_check_branch
      %56 = sbr.rel (0) target = $region29
    $region28: #{lstm_add_forward.1} parent=1 // pred_region
      %s58 = ssub.s32 1024, 1024
      %59 = vsyncadd [#allocation11], %s58
      %s60 = sshll.u32 [#allocation10], 4
      %s61 = int_to_ptr.vmem [resolvable:$true] %s60
      %66 = dma.hbm_to_vmem [thread:$0]  %s6, 1024, %s61, [#allocation11], 128, 128, 8
    $region29: #{lstm_add_forward.1} parent=1 // pred_fallthru
      _
    // Predicated region
    $region30: #{lstm_add_forward.1} parent=1 // pred_check
      _
    $region31: #{lstm_add_forward.1} parent=1 // pred_check_branch
      %68 = sbr.rel (0) target = $region33
    $region32: #{lstm_add_forward.1} parent=1 // pred_region
      _
    $region33: #{lstm_add_forward.1} parent=1 // pred_fallthru
      _
    // Predicated region
    $region34: #{lstm_add_forward.1} parent=1 // pred_check
      _
    $region35: #{lstm_add_forward.1} parent=1 // pred_check_branch
      %70 = sbr.rel (0) target = $region37
    $region36: #{lstm_add_forward.1} parent=1 // pred_region
      %71 = dma.done [#allocation6], 32
    $region37: #{lstm_add_forward.1} parent=1 // pred_fallthru
      _
    // Predicated region
    $region38: #{lstm_add_forward.1} parent=1 // pred_check
      _
    $region39: #{lstm_add_forward.1} parent=1 // pred_check_branch
      %73 = sbr.rel (0) target = $region41
    $region40: #{lstm_add_forward.1} parent=1 // pred_region
      %74 = dma.done [#allocation8], 32
    $region41: #{lstm_add_forward.1} parent=1 // pred_fallthru
      _
    // Predicated region
    $region42: #{lstm_add_forward.1} parent=1 // pred_check
      _
    $region43: #{lstm_add_forward.1} parent=1 // pred_check_branch
      %76 = sbr.rel (0) target = $region45
    $region44: #{lstm_add_forward.1} parent=1 // pred_region
      %77 = dma.done [#allocation5], 2048
    $region45: #{lstm_add_forward.1} parent=1 // pred_fallthru
      _
    // Predicated region
    $region46: #{lstm_add_forward.1} parent=1 // pred_check
      _
    $region47: #{lstm_add_forward.1} parent=1 // pred_check_branch
      %79 = sbr.rel (0) target = $region49
    $region48: #{lstm_add_forward.1} parent=1 // pred_region
      %80 = dma.done [#allocation11], 1024
    $region49: #{lstm_add_forward.1} parent=1 // pred_fallthru
      _
    %81 = sfence
    %vm82 = vcmask 261120
    %83 = vst.msk [vmem:[#allocation2] sm:$0xff] %vm82, 0.0
    %84 = vst.msk [vmem:[#allocation2 + $0x8] sm:$0xff] %vm82, 0.0
    %85 = vst.msk [vmem:[#allocation2 + $0x10] sm:$0xff] %vm82, 0.0
    %86 = vst.msk [vmem:[#allocation2 + $0x18] sm:$0xff] %vm82, 0.0
    %87 = vst.msk [vmem:[#allocation2 + $0x20] sm:$0xff] %vm82, 0.0
    %88 = vst.msk [vmem:[#allocation2 + $0x28] sm:$0xff] %vm82, 0.0
    %89 = vst.msk [vmem:[#allocation2 + $0x30] sm:$0xff] %vm82, 0.0
    %90 = vst.msk [vmem:[#allocation2 + $0x38] sm:$0xff] %vm82, 0.0
    %s91 = sld [smem:[#allocation4]]
    %s92 = sld [smem:[#allocation7]]
    %s93 = scalar_lea.vmem %s2, %s91
    %v94 = vld [vmem:[%s93] sm:$0x1]
    %v95 = vstv %s92
    %v96 = vmul.f32 %v94, %v95
    %vm97 = vcmask 253952
    %98 = vst.msk [vmem:[#allocation2] sm:$0x1] %vm97, %v96
    %s99 = sld [smem:[#allocation4 + $0x80]]
    %s100 = sld [smem:[#allocation7 + $0x80]]
    %s101 = scalar_lea.vmem %s2, %s99
    %v102 = vld [vmem:[%s101] sm:$0x1]
    %v103 = vstv %s100
    %v104 = vmul.f32 %v102, %v103
    %105 = vst.msk [vmem:[#allocation2 + $0x1] sm:$0x1] %vm97, %v104
    %s106 = sld [smem:[#allocation4 + $0x1]]
    %s107 = sld [smem:[#allocation7 + $0x1]]
    %s108 = scalar_lea.vmem %s2, %s106
    %v109 = vld [vmem:[%s108] sm:$0x1]
    %v110 = vstv %s107
    %v111 = vmul.f32 %v109, %v110
    %112 = vst.msk [vmem:[#allocation2 + $0x8] sm:$0x1] %vm97, %v111
    %s113 = sld [smem:[#allocation4 + $0x81]]
    %s114 = sld [smem:[#allocation7 + $0x81]]
    %s115 = scalar_lea.vmem %s2, %s113
    %v116 = vld [vmem:[%s115] sm:$0x1]
    %v117 = vstv %s114
    %v118 = vmul.f32 %v116, %v117
    %119 = vst.msk [vmem:[#allocation2 + $0x9] sm:$0x1] %vm97, %v118
    %s120 = sld [smem:[#allocation4 + $0x2]]
    %s121 = sld [smem:[#allocation7 + $0x2]]
    %s122 = scalar_lea.vmem %s2, %s120
    %v123 = vld [vmem:[%s122] sm:$0x1]
    %v124 = vstv %s121
    %v125 = vmul.f32 %v123, %v124
    %126 = vst.msk [vmem:[#allocation2 + $0x10] sm:$0x1] %vm97, %v125
    %s127 = sld [smem:[#allocation4 + $0x82]]
    %s128 = sld [smem:[#allocation7 + $0x82]]
    %s129 = scalar_lea.vmem %s2, %s127
    %v130 = vld [vmem:[%s129] sm:$0x1]
    %v131 = vstv %s128
    %v132 = vmul.f32 %v130, %v131
    %133 = vst.msk [vmem:[#allocation2 + $0x11] sm:$0x1] %vm97, %v132
    %s134 = sld [smem:[#allocation4 + $0x3]]
    %s135 = sld [smem:[#allocation7 + $0x3]]
    %s136 = scalar_lea.vmem %s2, %s134
    %v137 = vld [vmem:[%s136] sm:$0x1]
    %v138 = vstv %s135
    %v139 = vmul.f32 %v137, %v138
    %140 = vst.msk [vmem:[#allocation2 + $0x18] sm:$0x1] %vm97, %v139
    %s141 = sld [smem:[#allocation4 + $0x83]]
    %s142 = sld [smem:[#allocation7 + $0x83]]
    %s143 = scalar_lea.vmem %s2, %s141
    %v144 = vld [vmem:[%s143] sm:$0x1]
    %v145 = vstv %s142
    %v146 = vmul.f32 %v144, %v145
    %147 = vst.msk [vmem:[#allocation2 + $0x19] sm:$0x1] %vm97, %v146
    %s148 = sld [smem:[#allocation4 + $0x4]]
    %s149 = sld [smem:[#allocation7 + $0x4]]
    %s150 = scalar_lea.vmem %s2, %s148
    %v151 = vld [vmem:[%s150] sm:$0x1]
    %v152 = vstv %s149
    %v153 = vmul.f32 %v151, %v152
    %154 = vst.msk [vmem:[#allocation2 + $0x20] sm:$0x1] %vm97, %v153
    %s155 = sld [smem:[#allocation4 + $0x84]]
    %s156 = sld [smem:[#allocation7 + $0x84]]
    %s157 = scalar_lea.vmem %s2, %s155
    %v158 = vld [vmem:[%s157] sm:$0x1]
    %v159 = vstv %s156
    %v160 = vmul.f32 %v158, %v159
    %161 = vst.msk [vmem:[#allocation2 + $0x21] sm:$0x1] %vm97, %v160
    %s162 = sld [smem:[#allocation4 + $0x5]]
    %s163 = sld [smem:[#allocation7 + $0x5]]
    %s164 = scalar_lea.vmem %s2, %s162
    %v165 = vld [vmem:[%s164] sm:$0x1]
    %v166 = vstv %s163
    %v167 = vmul.f32 %v165, %v166
    %168 = vst.msk [vmem:[#allocation2 + $0x28] sm:$0x1] %vm97, %v167
    %s169 = sld [smem:[#allocation4 + $0x85]]
    %s170 = sld [smem:[#allocation7 + $0x85]]
    %s171 = scalar_lea.vmem %s2, %s169
    %v172 = vld [vmem:[%s171] sm:$0x1]
    %v173 = vstv %s170
    %v174 = vmul.f32 %v172, %v173
    %175 = vst.msk [vmem:[#allocation2 + $0x29] sm:$0x1] %vm97, %v174
    %s176 = sld [smem:[#allocation4 + $0x6]]
    %s177 = sld [smem:[#allocation7 + $0x6]]
    %s178 = scalar_lea.vmem %s2, %s176
    %v179 = vld [vmem:[%s178] sm:$0x1]
    %v180 = vstv %s177
    %v181 = vmul.f32 %v179, %v180
    %182 = vst.msk [vmem:[#allocation2 + $0x30] sm:$0x1] %vm97, %v181
    %s183 = sld [smem:[#allocation4 + $0x86]]
    %s184 = sld [smem:[#allocation7 + $0x86]]
    %s185 = scalar_lea.vmem %s2, %s183
    %v186 = vld [vmem:[%s185] sm:$0x1]
    %v187 = vstv %s184
    %v188 = vmul.f32 %v186, %v187
    %189 = vst.msk [vmem:[#allocation2 + $0x31] sm:$0x1] %vm97, %v188
    %s190 = sld [smem:[#allocation4 + $0x7]]
    %s191 = sld [smem:[#allocation7 + $0x7]]
    %s192 = scalar_lea.vmem %s2, %s190
    %v193 = vld [vmem:[%s192] sm:$0x1]
    %v194 = vstv %s191
    %v195 = vmul.f32 %v193, %v194
    %196 = vst.msk [vmem:[#allocation2 + $0x38] sm:$0x1] %vm97, %v195
    %s197 = sld [smem:[#allocation4 + $0x87]]
    %s198 = sld [smem:[#allocation7 + $0x87]]
    %s199 = scalar_lea.vmem %s2, %s197
    %v200 = vld [vmem:[%s199] sm:$0x1]
    %v201 = vstv %s198
    %v202 = vmul.f32 %v200, %v201
    %203 = vst.msk [vmem:[#allocation2 + $0x39] sm:$0x1] %vm97, %v202
    %v204 = vld [vmem:[#allocation2] sm:$0xff]
    %v205 = vld [vmem:[#allocation2 + $0x8] sm:$0xff]
    %v206 = vld [vmem:[#allocation2 + $0x10] sm:$0xff]
    %v207 = vld [vmem:[#allocation2 + $0x18] sm:$0xff]
    %v208 = vld [vmem:[#allocation2 + $0x20] sm:$0xff]
    %v209 = vld [vmem:[#allocation2 + $0x28] sm:$0xff]
    %v210 = vld [vmem:[#allocation2 + $0x30] sm:$0xff]
    %v211 = vld [vmem:[#allocation2 + $0x38] sm:$0xff]
    %v212 = vld [vmem:[%s3] sm:$0xff]
    %v213 = vld [vmem:[%s3 + $0x8] sm:$0xff]
    %v214 = vld [vmem:[%s3 + $0x10] sm:$0xff]
    %v215 = vld [vmem:[%s3 + $0x18] sm:$0xff]
    %v216 = vld [vmem:[%s3 + $0x20] sm:$0xff]
    %v217 = vld [vmem:[%s3 + $0x28] sm:$0xff]
    %v218 = vld [vmem:[%s3 + $0x30] sm:$0xff]
    %v219 = vld [vmem:[%s3 + $0x38] sm:$0xff]
    %v220 = vld [vmem:[%s5] sm:$0x3]
    %v222 = vlaneseq
    %v223 = vshrl.u32 %v222, 7
    %v224 = vsub.s32 0, %v223
    %v225 = vrot.slane %v220, %v224
    %v226 = vlaneseq
    %v227 = vshrl.u32 %v226, 7
    %v228 = vsub.s32 1, %v227
    %v229 = vrot.slane %v220, %v228
    %v233 = vsel %vm82, %v204, 0
    %v236 = vsel %vm82, %v205, 0
    %v239 = vsel %vm82, %v206, 0
    %v242 = vsel %vm82, %v207, 0
    %v245 = vsel %vm82, %v208, 0
    %v248 = vsel %vm82, %v209, 0
    %v251 = vsel %vm82, %v210, 0
    %v254 = vsel %vm82, %v211, 0
    %256 = vmatprep.subr.mxu0 0.0
    %257 = vmatpush1.msra.mxu0 0.0
    %258 = vmatprep.subr.mxu0 0.0
    %259 = vmatpush1.msra.mxu0 0.0
    %260 = vmatprep.subr.mxu0 0.0
    %261 = vmatpush1.msra.mxu0 0.0
    %262 = vmatprep.subr.mxu0 0.0
    %263 = vmatpush1.msra.mxu0 0.0
    %264 = vmatprep.subr.mxu0 0.0
    %265 = vmatpush1.msra.mxu0 0.0
    %266 = vmatprep.subr.mxu0 0.0
    %267 = vmatpush1.msra.mxu0 0.0
    %268 = vmatprep.subr.mxu0 0.0
    %269 = vmatpush1.msra.mxu0 0.0
    %270 = vmatprep.subr.mxu0 0.0
    %271 = vmatpush1.msra.mxu0 0.0
    %272 = vmatprep.subr.mxu0 0.0
    %273 = vmatpush1.msra.mxu0 0.0
    %274 = vmatprep.subr.mxu0 0.0
    %275 = vmatpush1.msra.mxu0 0.0
    %276 = vmatprep.subr.mxu0 0.0
    %277 = vmatpush1.msra.mxu0 0.0
    %278 = vmatprep.subr.mxu0 0.0
    %279 = vmatpush1.msra.mxu0 0.0
    %280 = vmatprep.subr.mxu0 %v219
    %281 = vmatpush1.msra.mxu0 %v218
    %282 = vmatprep.subr.mxu0 %v217
    %283 = vmatpush1.msra.mxu0 %v216
    %284 = vmatprep.subr.mxu0 %v215
    %285 = vmatpush1.msra.mxu0 %v214
    %286 = vmatprep.subr.mxu0 %v213
    %287 = vmatpush1.msra.mxu0 %v212
    %288 = vmatprep.subr.mxu0 0.0
    %289 = vmatpush2.msra.mxu0 0.0
    %290 = vmatprep.subr.mxu0 0.0
    %291 = vmatpush2.msra.mxu0 0.0
    %292 = vmatprep.subr.mxu0 0.0
    %293 = vmatpush2.msra.mxu0 0.0
    %294 = vmatprep.subr.mxu0 0.0
    %295 = vmatpush2.msra.mxu0 0.0
    %296 = vmatprep.subr.mxu0 0.0
    %297 = vmatpush2.msra.mxu0 0.0
    %298 = vmatprep.subr.mxu0 0.0
    %299 = vmatpush2.msra.mxu0 0.0
    %300 = vmatprep.subr.mxu0 0.0
    %301 = vmatpush2.msra.mxu0 0.0
    %302 = vmatprep.subr.mxu0 0.0
    %303 = vmatpush2.msra.mxu0 0.0
    %304 = vmatprep.subr.mxu0 0.0
    %305 = vmatpush2.msra.mxu0 0.0
    %306 = vmatprep.subr.mxu0 0.0
    %307 = vmatpush2.msra.mxu0 0.0
    %308 = vmatprep.subr.mxu0 0.0
    %309 = vmatpush2.msra.mxu0 0.0
    %310 = vmatprep.subr.mxu0 0.0
    %311 = vmatpush2.msra.mxu0 0.0
    %312 = vmatprep.subr.mxu0 0.0
    %313 = vmatpush2.msra.mxu0 0.0
    %314 = vmatprep.subr.mxu0 0.0
    %315 = vmatpush2.msra.mxu0 0.0
    %316 = vmatprep.subr.mxu0 0.0
    %317 = vmatpush2.msra.mxu0 0.0
    %318 = vmatprep.subr.mxu0 0.0
    %319 = vmatpush2.msra.mxu0 0.0
    %320 = vmatprep.mubr.f32.mxu0 0.0
    %321 = vmatmul.mubr.f32.gmra.mxu0 %v233
    %v322 = vpop.f32.mrf.mxu0
    %v323 = vadd.f32 %v225, %v322
    %v324 = vpop.f32.mrf.mxu0
    %v325 = vadd.f32 %v229, %v324
    %326 = vmatprep.mubr.f32.mxu0 0.0
    %327 = vmatmul.mubr.f32.gmra.mxu0 %v236
    %v328 = vpop.f32.mrf.mxu0
    %v329 = vadd.f32 %v225, %v328
    %v330 = vpop.f32.mrf.mxu0
    %v331 = vadd.f32 %v229, %v330
    %332 = vmatprep.mubr.f32.mxu0 0.0
    %333 = vmatmul.mubr.f32.gmra.mxu0 %v239
    %v334 = vpop.f32.mrf.mxu0
    %v335 = vadd.f32 %v225, %v334
    %v336 = vpop.f32.mrf.mxu0
    %v337 = vadd.f32 %v229, %v336
    %338 = vmatprep.mubr.f32.mxu0 0.0
    %339 = vmatmul.mubr.f32.gmra.mxu0 %v242
    %v340 = vpop.f32.mrf.mxu0
    %v341 = vadd.f32 %v225, %v340
    %v342 = vpop.f32.mrf.mxu0
    %v343 = vadd.f32 %v229, %v342
    %344 = vmatprep.mubr.f32.mxu0 0.0
    %345 = vmatmul.mubr.f32.gmra.mxu0 %v245
    %v346 = vpop.f32.mrf.mxu0
    %v347 = vadd.f32 %v225, %v346
    %v348 = vpop.f32.mrf.mxu0
    %v349 = vadd.f32 %v229, %v348
    %350 = vmatprep.mubr.f32.mxu0 0.0
    %351 = vmatmul.mubr.f32.gmra.mxu0 %v248
    %v352 = vpop.f32.mrf.mxu0
    %v353 = vadd.f32 %v225, %v352
    %v354 = vpop.f32.mrf.mxu0
    %v355 = vadd.f32 %v229, %v354
    %356 = vmatprep.mubr.f32.mxu0 0.0
    %357 = vmatmul.mubr.f32.gmra.mxu0 %v251
    %v358 = vpop.f32.mrf.mxu0
    %v359 = vadd.f32 %v225, %v358
    %v360 = vpop.f32.mrf.mxu0
    %v361 = vadd.f32 %v229, %v360
    %362 = vmatprep.mubr.f32.mxu0 0.0
    %363 = vmatmul.mubr.f32.gmra.mxu0 %v254
    %v364 = vpop.f32.mrf.mxu0
    %v365 = vadd.f32 %v225, %v364
    %v366 = vpop.f32.mrf.mxu0
    %v367 = vadd.f32 %v229, %v366
    %368 = vdwg.mxu0
    %369 = vst [vmem:[#allocation3] sm:$0xff] %v323
    %370 = vst [vmem:[#allocation3 + $0x8] sm:$0xff] %v325
    %371 = vst [vmem:[#allocation3 + $0x10] sm:$0xff] %v329
    %372 = vst [vmem:[#allocation3 + $0x18] sm:$0xff] %v331
    %373 = vst [vmem:[#allocation3 + $0x20] sm:$0xff] %v335
    %374 = vst [vmem:[#allocation3 + $0x28] sm:$0xff] %v337
    %375 = vst [vmem:[#allocation3 + $0x30] sm:$0xff] %v341
    %376 = vst [vmem:[#allocation3 + $0x38] sm:$0xff] %v343
    %377 = vst [vmem:[#allocation3 + $0x40] sm:$0xff] %v347
    %378 = vst [vmem:[#allocation3 + $0x48] sm:$0xff] %v349
    %379 = vst [vmem:[#allocation3 + $0x50] sm:$0xff] %v353
    %380 = vst [vmem:[#allocation3 + $0x58] sm:$0xff] %v355
    %381 = vst [vmem:[#allocation3 + $0x60] sm:$0xff] %v359
    %382 = vst [vmem:[#allocation3 + $0x68] sm:$0xff] %v361
    %383 = vst [vmem:[#allocation3 + $0x70] sm:$0xff] %v365
    %384 = vst [vmem:[#allocation3 + $0x78] sm:$0xff] %v367
    %v385 = vlaneseq
    %v386 = vand.u32 %v385, 127
    %v387 = vadd.s32 %v386, 128
    %v388 = vand.u32 %v386, 32
    %v389 = vand.u32 %v387, 32
    %vm390 = vcmp.eq.s32.totalorder %v388, 0
    %vm391 = vcmp.eq.s32.totalorder %v389, 0
    %v392 = vld [vmem:[#allocation9] sm:$0xff]
    %v393 = vld [vmem:[#allocation9 + $0x8] sm:$0xff]
    %v394 = vld [vmem:[#allocation9 + $0x10] sm:$0xff]
    %v395 = vld [vmem:[#allocation9 + $0x18] sm:$0xff]
    %v396 = vld [vmem:[#allocation9 + $0x20] sm:$0xff]
    %v397 = vld [vmem:[#allocation9 + $0x28] sm:$0xff]
    %v398 = vld [vmem:[#allocation9 + $0x30] sm:$0xff]
    %v399 = vld [vmem:[#allocation9 + $0x38] sm:$0xff]
    %v400 = vld [vmem:[#allocation9 + $0x40] sm:$0xff]
    %v401 = vld [vmem:[#allocation9 + $0x48] sm:$0xff]
    %v402 = vld [vmem:[#allocation9 + $0x50] sm:$0xff]
    %v403 = vld [vmem:[#allocation9 + $0x58] sm:$0xff]
    %v404 = vld [vmem:[#allocation9 + $0x60] sm:$0xff]
    %v405 = vld [vmem:[#allocation9 + $0x68] sm:$0xff]
    %v406 = vld [vmem:[#allocation9 + $0x70] sm:$0xff]
    %v407 = vld [vmem:[#allocation9 + $0x78] sm:$0xff]
    %v408 = vld [vmem:[#allocation3] sm:$0xff]
    %v409 = vld [vmem:[#allocation3 + $0x8] sm:$0xff]
    %v410 = vld [vmem:[#allocation3 + $0x70] sm:$0xff]
    %v411 = vld [vmem:[#allocation3 + $0x78] sm:$0xff]
    %v412 = vsel %vm390, %v408, %v410
    %v413 = vsel %vm391, %v409, %v411
    %vm414 = vcmask 523264
    %v416 = vsel %vm414, 0.0, 0
    %418 = vmatprep.subr.mxu0 0.0
    %419 = vmatpush1.msra.mxu0 0.0
    %420 = vmatprep.subr.mxu0 0.0
    %421 = vmatpush1.msra.mxu0 0.0
    %422 = vmatprep.subr.mxu0 0.0
    %423 = vmatpush1.msra.mxu0 0.0
    %424 = vmatprep.subr.mxu0 0.0
    %425 = vmatpush1.msra.mxu0 0.0
    %426 = vmatprep.subr.mxu0 0.0
    %427 = vmatpush1.msra.mxu0 0.0
    %428 = vmatprep.subr.mxu0 0.0
    %429 = vmatpush1.msra.mxu0 0.0
    %430 = vmatprep.subr.mxu0 0.0
    %431 = vmatpush1.msra.mxu0 0.0
    %432 = vmatprep.subr.mxu0 0.0
    %433 = vmatpush1.msra.mxu0 0.0
    %434 = vmatprep.subr.mxu0 %v407
    %435 = vmatpush1.msra.mxu0 %v406
    %436 = vmatprep.subr.mxu0 %v405
    %437 = vmatpush1.msra.mxu0 %v404
    %438 = vmatprep.subr.mxu0 %v403
    %439 = vmatpush1.msra.mxu0 %v402
    %440 = vmatprep.subr.mxu0 %v401
    %441 = vmatpush1.msra.mxu0 %v400
    %442 = vmatprep.subr.mxu0 %v399
    %443 = vmatpush1.msra.mxu0 %v398
    %444 = vmatprep.subr.mxu0 %v397
    %445 = vmatpush1.msra.mxu0 %v396
    %446 = vmatprep.subr.mxu0 %v395
    %447 = vmatpush1.msra.mxu0 %v394
    %448 = vmatprep.subr.mxu0 %v393
    %449 = vmatpush1.msra.mxu0 %v392
    %450 = vmatprep.subr.mxu0 0.0
    %451 = vmatpush2.msra.mxu0 0.0
    %452 = vmatprep.subr.mxu0 0.0
    %453 = vmatpush2.msra.mxu0 0.0
    %454 = vmatprep.subr.mxu0 0.0
    %455 = vmatpush2.msra.mxu0 0.0
    %456 = vmatprep.subr.mxu0 0.0
    %457 = vmatpush2.msra.mxu0 0.0
    %458 = vmatprep.subr.mxu0 0.0
    %459 = vmatpush2.msra.mxu0 0.0
    %460 = vmatprep.subr.mxu0 0.0
    %461 = vmatpush2.msra.mxu0 0.0
    %462 = vmatprep.subr.mxu0 0.0
    %463 = vmatpush2.msra.mxu0 0.0
    %464 = vmatprep.subr.mxu0 0.0
    %465 = vmatpush2.msra.mxu0 0.0
    %466 = vmatprep.subr.mxu0 0.0
    %467 = vmatpush2.msra.mxu0 0.0
    %468 = vmatprep.subr.mxu0 0.0
    %469 = vmatpush2.msra.mxu0 0.0
    %470 = vmatprep.subr.mxu0 0.0
    %471 = vmatpush2.msra.mxu0 0.0
    %472 = vmatprep.subr.mxu0 0.0
    %473 = vmatpush2.msra.mxu0 0.0
    %474 = vmatprep.subr.mxu0 0.0
    %475 = vmatpush2.msra.mxu0 0.0
    %476 = vmatprep.subr.mxu0 0.0
    %477 = vmatpush2.msra.mxu0 0.0
    %478 = vmatprep.subr.mxu0 0.0
    %479 = vmatpush2.msra.mxu0 0.0
    %480 = vmatprep.subr.mxu0 0.0
    %481 = vmatpush2.msra.mxu0 0.0
    %482 = vmatprep.mubr.f32.mxu0 0.0
    %483 = vmatmul.mubr.f32.gmra.mxu0 %v416
    %v484 = vpop.f32.mrf.mxu0
    %v485 = vadd.f32 0.0, %v484
    %v486 = vpop.f32.mrf.mxu0
    %v487 = vadd.f32 0.0, %v486
    %488 = vdwg.mxu0
    %v489 = vadd.f32 %v412, %v485
    %v490 = vadd.f32 %v413, %v487
    %v491 = vmul.f32 %v489, 0.5
    %v492 = vmul.f32 %v490, 0.5
    %v493 = vtanh.pop %v491
    %v494 = vtanh.pop %v492
    %v495 = vadd.f32 %v493, 1.0
    %v496 = vadd.f32 %v494, 1.0
    %v497 = vmul.f32 %v495, 0.5
    %v498 = vmul.f32 %v496, 0.5
    %v499 = vtanh.pop %v490
    %v500 = vmul.f32 %v497, 0.0
    %502 = vrot.lane.b32.xlu0 %v499, 64
    %v503 = vpop.permute.xlu0 %502
    %v505 = vmul.f32 %v497, %v503
    %507 = vrot.lane.b32.xlu0 %v505, 64
    %v508 = vpop.permute.xlu0 %507
    %v510 = vadd.f32 %v500, %v508
    %v511 = vtanh.pop %v510
    %513 = vrot.lane.b32.xlu0 %v511, 64
    %v514 = vpop.permute.xlu0 %513
    %v516 = vmul.f32 %v498, %v514
    %v517 = vld [vmem:[#allocation3 + $0x10] sm:$0xff]
    %v518 = vld [vmem:[#allocation3 + $0x18] sm:$0xff]
    %v519 = vld [vmem:[#allocation3 + $0x60] sm:$0xff]
    %v520 = vld [vmem:[#allocation3 + $0x68] sm:$0xff]
    %v521 = vsel %vm390, %v517, %v519
    %v522 = vsel %vm391, %v518, %v520
    %v524 = vsel %vm414, %v516, 0
    %526 = vmatprep.subr.mxu0 0.0
    %527 = vmatpush1.msra.mxu0 0.0
    %528 = vmatprep.subr.mxu0 0.0
    %529 = vmatpush1.msra.mxu0 0.0
    %530 = vmatprep.subr.mxu0 0.0
    %531 = vmatpush1.msra.mxu0 0.0
    %532 = vmatprep.subr.mxu0 0.0
    %533 = vmatpush1.msra.mxu0 0.0
    %534 = vmatprep.subr.mxu0 0.0
    %535 = vmatpush1.msra.mxu0 0.0
    %536 = vmatprep.subr.mxu0 0.0
    %537 = vmatpush1.msra.mxu0 0.0
    %538 = vmatprep.subr.mxu0 0.0
    %539 = vmatpush1.msra.mxu0 0.0
    %540 = vmatprep.subr.mxu0 0.0
    %541 = vmatpush1.msra.mxu0 0.0
    %542 = vmatprep.subr.mxu0 %v407
    %543 = vmatpush1.msra.mxu0 %v406
    %544 = vmatprep.subr.mxu0 %v405
    %545 = vmatpush1.msra.mxu0 %v404
    %546 = vmatprep.subr.mxu0 %v403
    %547 = vmatpush1.msra.mxu0 %v402
    %548 = vmatprep.subr.mxu0 %v401
    %549 = vmatpush1.msra.mxu0 %v400
    %550 = vmatprep.subr.mxu0 %v399
    %551 = vmatpush1.msra.mxu0 %v398
    %552 = vmatprep.subr.mxu0 %v397
    %553 = vmatpush1.msra.mxu0 %v396
    %554 = vmatprep.subr.mxu0 %v395
    %555 = vmatpush1.msra.mxu0 %v394
    %556 = vmatprep.subr.mxu0 %v393
    %557 = vmatpush1.msra.mxu0 %v392
    %558 = vmatprep.subr.mxu0 0.0
    %559 = vmatpush2.msra.mxu0 0.0
    %560 = vmatprep.subr.mxu0 0.0
    %561 = vmatpush2.msra.mxu0 0.0
    %562 = vmatprep.subr.mxu0 0.0
    %563 = vmatpush2.msra.mxu0 0.0
    %564 = vmatprep.subr.mxu0 0.0
    %565 = vmatpush2.msra.mxu0 0.0
    %566 = vmatprep.subr.mxu0 0.0
    %567 = vmatpush2.msra.mxu0 0.0
    %568 = vmatprep.subr.mxu0 0.0
    %569 = vmatpush2.msra.mxu0 0.0
    %570 = vmatprep.subr.mxu0 0.0
    %571 = vmatpush2.msra.mxu0 0.0
    %572 = vmatprep.subr.mxu0 0.0
    %573 = vmatpush2.msra.mxu0 0.0
    %574 = vmatprep.subr.mxu0 0.0
    %575 = vmatpush2.msra.mxu0 0.0
    %576 = vmatprep.subr.mxu0 0.0
    %577 = vmatpush2.msra.mxu0 0.0
    %578 = vmatprep.subr.mxu0 0.0
    %579 = vmatpush2.msra.mxu0 0.0
    %580 = vmatprep.subr.mxu0 0.0
    %581 = vmatpush2.msra.mxu0 0.0
    %582 = vmatprep.subr.mxu0 0.0
    %583 = vmatpush2.msra.mxu0 0.0
    %584 = vmatprep.subr.mxu0 0.0
    %585 = vmatpush2.msra.mxu0 0.0
    %586 = vmatprep.subr.mxu0 0.0
    %587 = vmatpush2.msra.mxu0 0.0
    %588 = vmatprep.subr.mxu0 0.0
    %589 = vmatpush2.msra.mxu0 0.0
    %590 = vmatprep.mubr.f32.mxu0 0.0
    %591 = vmatmul.mubr.f32.gmra.mxu0 %v524
    %v592 = vpop.f32.mrf.mxu0
    %v593 = vadd.f32 0.0, %v592
    %v594 = vpop.f32.mrf.mxu0
    %v595 = vadd.f32 0.0, %v594
    %596 = vdwg.mxu0
    %v597 = vadd.f32 %v521, %v593
    %v598 = vadd.f32 %v522, %v595
    %v599 = vmul.f32 %v597, 0.5
    %v600 = vmul.f32 %v598, 0.5
    %v601 = vtanh.pop %v599
    %v602 = vtanh.pop %v600
    %v603 = vadd.f32 %v601, 1.0
    %v604 = vadd.f32 %v602, 1.0
    %v605 = vmul.f32 %v603, 0.5
    %v606 = vmul.f32 %v604, 0.5
    %v607 = vtanh.pop %v598
    %v608 = vmul.f32 %v605, %v510
    %610 = vrot.lane.b32.xlu0 %v607, 64
    %v611 = vpop.permute.xlu0 %610
    %v613 = vmul.f32 %v605, %v611
    %615 = vrot.lane.b32.xlu0 %v613, 64
    %v616 = vpop.permute.xlu0 %615
    %v618 = vadd.f32 %v608, %v616
    %v619 = vtanh.pop %v618
    %621 = vrot.lane.b32.xlu0 %v619, 64
    %v622 = vpop.permute.xlu0 %621
    %v624 = vmul.f32 %v606, %v622
    %v625 = vld [vmem:[#allocation3 + $0x20] sm:$0xff]
    %v626 = vld [vmem:[#allocation3 + $0x28] sm:$0xff]
    %v627 = vld [vmem:[#allocation3 + $0x50] sm:$0xff]
    %v628 = vld [vmem:[#allocation3 + $0x58] sm:$0xff]
    %v629 = vsel %vm390, %v625, %v627
    %v630 = vsel %vm391, %v626, %v628
    %v632 = vsel %vm414, %v624, 0
    %634 = vmatprep.subr.mxu0 0.0
    %635 = vmatpush1.msra.mxu0 0.0
    %636 = vmatprep.subr.mxu0 0.0
    %637 = vmatpush1.msra.mxu0 0.0
    %638 = vmatprep.subr.mxu0 0.0
    %639 = vmatpush1.msra.mxu0 0.0
    %640 = vmatprep.subr.mxu0 0.0
    %641 = vmatpush1.msra.mxu0 0.0
    %642 = vmatprep.subr.mxu0 0.0
    %643 = vmatpush1.msra.mxu0 0.0
    %644 = vmatprep.subr.mxu0 0.0
    %645 = vmatpush1.msra.mxu0 0.0
    %646 = vmatprep.subr.mxu0 0.0
    %647 = vmatpush1.msra.mxu0 0.0
    %648 = vmatprep.subr.mxu0 0.0
    %649 = vmatpush1.msra.mxu0 0.0
    %650 = vmatprep.subr.mxu0 %v407
    %651 = vmatpush1.msra.mxu0 %v406
    %652 = vmatprep.subr.mxu0 %v405
    %653 = vmatpush1.msra.mxu0 %v404
    %654 = vmatprep.subr.mxu0 %v403
    %655 = vmatpush1.msra.mxu0 %v402
    %656 = vmatprep.subr.mxu0 %v401
    %657 = vmatpush1.msra.mxu0 %v400
    %658 = vmatprep.subr.mxu0 %v399
    %659 = vmatpush1.msra.mxu0 %v398
    %660 = vmatprep.subr.mxu0 %v397
    %661 = vmatpush1.msra.mxu0 %v396
    %662 = vmatprep.subr.mxu0 %v395
    %663 = vmatpush1.msra.mxu0 %v394
    %664 = vmatprep.subr.mxu0 %v393
    %665 = vmatpush1.msra.mxu0 %v392
    %666 = vmatprep.subr.mxu0 0.0
    %667 = vmatpush2.msra.mxu0 0.0
    %668 = vmatprep.subr.mxu0 0.0
    %669 = vmatpush2.msra.mxu0 0.0
    %670 = vmatprep.subr.mxu0 0.0
    %671 = vmatpush2.msra.mxu0 0.0
    %672 = vmatprep.subr.mxu0 0.0
    %673 = vmatpush2.msra.mxu0 0.0
    %674 = vmatprep.subr.mxu0 0.0
    %675 = vmatpush2.msra.mxu0 0.0
    %676 = vmatprep.subr.mxu0 0.0
    %677 = vmatpush2.msra.mxu0 0.0
    %678 = vmatprep.subr.mxu0 0.0
    %679 = vmatpush2.msra.mxu0 0.0
    %680 = vmatprep.subr.mxu0 0.0
    %681 = vmatpush2.msra.mxu0 0.0
    %682 = vmatprep.subr.mxu0 0.0
    %683 = vmatpush2.msra.mxu0 0.0
    %684 = vmatprep.subr.mxu0 0.0
    %685 = vmatpush2.msra.mxu0 0.0
    %686 = vmatprep.subr.mxu0 0.0
    %687 = vmatpush2.msra.mxu0 0.0
    %688 = vmatprep.subr.mxu0 0.0
    %689 = vmatpush2.msra.mxu0 0.0
    %690 = vmatprep.subr.mxu0 0.0
    %691 = vmatpush2.msra.mxu0 0.0
    %692 = vmatprep.subr.mxu0 0.0
    %693 = vmatpush2.msra.mxu0 0.0
    %694 = vmatprep.subr.mxu0 0.0
    %695 = vmatpush2.msra.mxu0 0.0
    %696 = vmatprep.subr.mxu0 0.0
    %697 = vmatpush2.msra.mxu0 0.0
    %698 = vmatprep.mubr.f32.mxu0 0.0
    %699 = vmatmul.mubr.f32.gmra.mxu0 %v632
    %v700 = vpop.f32.mrf.mxu0
    %v701 = vadd.f32 0.0, %v700
    %v702 = vpop.f32.mrf.mxu0
    %v703 = vadd.f32 0.0, %v702
    %704 = vdwg.mxu0
    %v705 = vadd.f32 %v629, %v701
    %v706 = vadd.f32 %v630, %v703
    %v707 = vmul.f32 %v705, 0.5
    %v708 = vmul.f32 %v706, 0.5
    %v709 = vtanh.pop %v707
    %v710 = vtanh.pop %v708
    %v711 = vadd.f32 %v709, 1.0
    %v712 = vadd.f32 %v710, 1.0
    %v713 = vmul.f32 %v711, 0.5
    %v714 = vmul.f32 %v712, 0.5
    %v715 = vtanh.pop %v706
    %v716 = vmul.f32 %v713, %v618
    %718 = vrot.lane.b32.xlu0 %v715, 64
    %v719 = vpop.permute.xlu0 %718
    %v721 = vmul.f32 %v713, %v719
    %723 = vrot.lane.b32.xlu0 %v721, 64
    %v724 = vpop.permute.xlu0 %723
    %v726 = vadd.f32 %v716, %v724
    %v727 = vtanh.pop %v726
    %729 = vrot.lane.b32.xlu0 %v727, 64
    %v730 = vpop.permute.xlu0 %729
    %v732 = vmul.f32 %v714, %v730
    %v733 = vld [vmem:[#allocation3 + $0x30] sm:$0xff]
    %v734 = vld [vmem:[#allocation3 + $0x38] sm:$0xff]
    %v735 = vld [vmem:[#allocation3 + $0x40] sm:$0xff]
    %v736 = vld [vmem:[#allocation3 + $0x48] sm:$0xff]
    %v737 = vsel %vm390, %v733, %v735
    %v738 = vsel %vm391, %v734, %v736
    %v740 = vsel %vm414, %v732, 0
    %742 = vmatprep.subr.mxu0 0.0
    %743 = vmatpush1.msra.mxu0 0.0
    %744 = vmatprep.subr.mxu0 0.0
    %745 = vmatpush1.msra.mxu0 0.0
    %746 = vmatprep.subr.mxu0 0.0
    %747 = vmatpush1.msra.mxu0 0.0
    %748 = vmatprep.subr.mxu0 0.0
    %749 = vmatpush1.msra.mxu0 0.0
    %750 = vmatprep.subr.mxu0 0.0
    %751 = vmatpush1.msra.mxu0 0.0
    %752 = vmatprep.subr.mxu0 0.0
    %753 = vmatpush1.msra.mxu0 0.0
    %754 = vmatprep.subr.mxu0 0.0
    %755 = vmatpush1.msra.mxu0 0.0
    %756 = vmatprep.subr.mxu0 0.0
    %757 = vmatpush1.msra.mxu0 0.0
    %758 = vmatprep.subr.mxu0 %v407
    %759 = vmatpush1.msra.mxu0 %v406
    %760 = vmatprep.subr.mxu0 %v405
    %761 = vmatpush1.msra.mxu0 %v404
    %762 = vmatprep.subr.mxu0 %v403
    %763 = vmatpush1.msra.mxu0 %v402
    %764 = vmatprep.subr.mxu0 %v401
    %765 = vmatpush1.msra.mxu0 %v400
    %766 = vmatprep.subr.mxu0 %v399
    %767 = vmatpush1.msra.mxu0 %v398
    %768 = vmatprep.subr.mxu0 %v397
    %769 = vmatpush1.msra.mxu0 %v396
    %770 = vmatprep.subr.mxu0 %v395
    %771 = vmatpush1.msra.mxu0 %v394
    %772 = vmatprep.subr.mxu0 %v393
    %773 = vmatpush1.msra.mxu0 %v392
    %774 = vmatprep.subr.mxu0 0.0
    %775 = vmatpush2.msra.mxu0 0.0
    %776 = vmatprep.subr.mxu0 0.0
    %777 = vmatpush2.msra.mxu0 0.0
    %778 = vmatprep.subr.mxu0 0.0
    %779 = vmatpush2.msra.mxu0 0.0
    %780 = vmatprep.subr.mxu0 0.0
    %781 = vmatpush2.msra.mxu0 0.0
    %782 = vmatprep.subr.mxu0 0.0
    %783 = vmatpush2.msra.mxu0 0.0
    %784 = vmatprep.subr.mxu0 0.0
    %785 = vmatpush2.msra.mxu0 0.0
    %786 = vmatprep.subr.mxu0 0.0
    %787 = vmatpush2.msra.mxu0 0.0
    %788 = vmatprep.subr.mxu0 0.0
    %789 = vmatpush2.msra.mxu0 0.0
    %790 = vmatprep.subr.mxu0 0.0
    %791 = vmatpush2.msra.mxu0 0.0
    %792 = vmatprep.subr.mxu0 0.0
    %793 = vmatpush2.msra.mxu0 0.0
    %794 = vmatprep.subr.mxu0 0.0
    %795 = vmatpush2.msra.mxu0 0.0
    %796 = vmatprep.subr.mxu0 0.0
    %797 = vmatpush2.msra.mxu0 0.0
    %798 = vmatprep.subr.mxu0 0.0
    %799 = vmatpush2.msra.mxu0 0.0
    %800 = vmatprep.subr.mxu0 0.0
    %801 = vmatpush2.msra.mxu0 0.0
    %802 = vmatprep.subr.mxu0 0.0
    %803 = vmatpush2.msra.mxu0 0.0
    %804 = vmatprep.subr.mxu0 0.0
    %805 = vmatpush2.msra.mxu0 0.0
    %806 = vmatprep.mubr.f32.mxu0 0.0
    %807 = vmatmul.mubr.f32.gmra.mxu0 %v740
    %v808 = vpop.f32.mrf.mxu0
    %v809 = vadd.f32 0.0, %v808
    %v810 = vpop.f32.mrf.mxu0
    %v811 = vadd.f32 0.0, %v810
    %812 = vdwg.mxu0
    %v813 = vadd.f32 %v737, %v809
    %v814 = vadd.f32 %v738, %v811
    %v815 = vmul.f32 %v813, 0.5
    %v816 = vmul.f32 %v814, 0.5
    %v817 = vtanh.pop %v815
    %v818 = vtanh.pop %v816
    %v819 = vadd.f32 %v817, 1.0
    %v820 = vadd.f32 %v818, 1.0
    %v821 = vmul.f32 %v819, 0.5
    %v822 = vmul.f32 %v820, 0.5
    %v823 = vtanh.pop %v814
    %v824 = vmul.f32 %v821, %v726
    %826 = vrot.lane.b32.xlu0 %v823, 64
    %v827 = vpop.permute.xlu0 %826
    %v829 = vmul.f32 %v821, %v827
    %831 = vrot.lane.b32.xlu0 %v829, 64
    %v832 = vpop.permute.xlu0 %831
    %v834 = vadd.f32 %v824, %v832
    %v835 = vtanh.pop %v834
    %837 = vrot.lane.b32.xlu0 %v835, 64
    %v838 = vpop.permute.xlu0 %837
    %v840 = vmul.f32 %v822, %v838
    %v841 = vsel %vm390, %v735, %v733
    %v842 = vsel %vm391, %v736, %v734
    %v844 = vsel %vm414, %v840, 0
    %846 = vmatprep.subr.mxu0 0.0
    %847 = vmatpush1.msra.mxu0 0.0
    %848 = vmatprep.subr.mxu0 0.0
    %849 = vmatpush1.msra.mxu0 0.0
    %850 = vmatprep.subr.mxu0 0.0
    %851 = vmatpush1.msra.mxu0 0.0
    %852 = vmatprep.subr.mxu0 0.0
    %853 = vmatpush1.msra.mxu0 0.0
    %854 = vmatprep.subr.mxu0 0.0
    %855 = vmatpush1.msra.mxu0 0.0
    %856 = vmatprep.subr.mxu0 0.0
    %857 = vmatpush1.msra.mxu0 0.0
    %858 = vmatprep.subr.mxu0 0.0
    %859 = vmatpush1.msra.mxu0 0.0
    %860 = vmatprep.subr.mxu0 0.0
    %861 = vmatpush1.msra.mxu0 0.0
    %862 = vmatprep.subr.mxu0 %v407
    %863 = vmatpush1.msra.mxu0 %v406
    %864 = vmatprep.subr.mxu0 %v405
    %865 = vmatpush1.msra.mxu0 %v404
    %866 = vmatprep.subr.mxu0 %v403
    %867 = vmatpush1.msra.mxu0 %v402
    %868 = vmatprep.subr.mxu0 %v401
    %869 = vmatpush1.msra.mxu0 %v400
    %870 = vmatprep.subr.mxu0 %v399
    %871 = vmatpush1.msra.mxu0 %v398
    %872 = vmatprep.subr.mxu0 %v397
    %873 = vmatpush1.msra.mxu0 %v396
    %874 = vmatprep.subr.mxu0 %v395
    %875 = vmatpush1.msra.mxu0 %v394
    %876 = vmatprep.subr.mxu0 %v393
    %877 = vmatpush1.msra.mxu0 %v392
    %878 = vmatprep.subr.mxu0 0.0
    %879 = vmatpush2.msra.mxu0 0.0
    %880 = vmatprep.subr.mxu0 0.0
    %881 = vmatpush2.msra.mxu0 0.0
    %882 = vmatprep.subr.mxu0 0.0
    %883 = vmatpush2.msra.mxu0 0.0
    %884 = vmatprep.subr.mxu0 0.0
    %885 = vmatpush2.msra.mxu0 0.0
    %886 = vmatprep.subr.mxu0 0.0
    %887 = vmatpush2.msra.mxu0 0.0
    %888 = vmatprep.subr.mxu0 0.0
    %889 = vmatpush2.msra.mxu0 0.0
    %890 = vmatprep.subr.mxu0 0.0
    %891 = vmatpush2.msra.mxu0 0.0
    %892 = vmatprep.subr.mxu0 0.0
    %893 = vmatpush2.msra.mxu0 0.0
    %894 = vmatprep.subr.mxu0 0.0
    %895 = vmatpush2.msra.mxu0 0.0
    %896 = vmatprep.subr.mxu0 0.0
    %897 = vmatpush2.msra.mxu0 0.0
    %898 = vmatprep.subr.mxu0 0.0
    %899 = vmatpush2.msra.mxu0 0.0
    %900 = vmatprep.subr.mxu0 0.0
    %901 = vmatpush2.msra.mxu0 0.0
    %902 = vmatprep.subr.mxu0 0.0
    %903 = vmatpush2.msra.mxu0 0.0
    %904 = vmatprep.subr.mxu0 0.0
    %905 = vmatpush2.msra.mxu0 0.0
    %906 = vmatprep.subr.mxu0 0.0
    %907 = vmatpush2.msra.mxu0 0.0
    %908 = vmatprep.subr.mxu0 0.0
    %909 = vmatpush2.msra.mxu0 0.0
    %910 = vmatprep.mubr.f32.mxu0 0.0
    %911 = vmatmul.mubr.f32.gmra.mxu0 %v844
    %v912 = vpop.f32.mrf.mxu0
    %v913 = vadd.f32 0.0, %v912
    %v914 = vpop.f32.mrf.mxu0
    %v915 = vadd.f32 0.0, %v914
    %916 = vdwg.mxu0
    %v917 = vadd.f32 %v841, %v913
    %v918 = vadd.f32 %v842, %v915
    %v919 = vmul.f32 %v917, 0.5
    %v920 = vmul.f32 %v918, 0.5
    %v921 = vtanh.pop %v919
    %v922 = vtanh.pop %v920
    %v923 = vadd.f32 %v921, 1.0
    %v924 = vadd.f32 %v922, 1.0
    %v925 = vmul.f32 %v923, 0.5
    %v926 = vmul.f32 %v924, 0.5
    %v927 = vtanh.pop %v918
    %v928 = vmul.f32 %v925, %v834
    %930 = vrot.lane.b32.xlu0 %v927, 64
    %v931 = vpop.permute.xlu0 %930
    %v933 = vmul.f32 %v925, %v931
    %935 = vrot.lane.b32.xlu0 %v933, 64
    %v936 = vpop.permute.xlu0 %935
    %v938 = vadd.f32 %v928, %v936
    %v939 = vtanh.pop %v938
    %941 = vrot.lane.b32.xlu0 %v939, 64
    %v942 = vpop.permute.xlu0 %941
    %v944 = vmul.f32 %v926, %v942
    %v945 = vsel %vm390, %v627, %v625
    %v946 = vsel %vm391, %v628, %v626
    %v948 = vsel %vm414, %v944, 0
    %950 = vmatprep.subr.mxu0 0.0
    %951 = vmatpush1.msra.mxu0 0.0
    %952 = vmatprep.subr.mxu0 0.0
    %953 = vmatpush1.msra.mxu0 0.0
    %954 = vmatprep.subr.mxu0 0.0
    %955 = vmatpush1.msra.mxu0 0.0
    %956 = vmatprep.subr.mxu0 0.0
    %957 = vmatpush1.msra.mxu0 0.0
    %958 = vmatprep.subr.mxu0 0.0
    %959 = vmatpush1.msra.mxu0 0.0
    %960 = vmatprep.subr.mxu0 0.0
    %961 = vmatpush1.msra.mxu0 0.0
    %962 = vmatprep.subr.mxu0 0.0
    %963 = vmatpush1.msra.mxu0 0.0
    %964 = vmatprep.subr.mxu0 0.0
    %965 = vmatpush1.msra.mxu0 0.0
    %966 = vmatprep.subr.mxu0 %v407
    %967 = vmatpush1.msra.mxu0 %v406
    %968 = vmatprep.subr.mxu0 %v405
    %969 = vmatpush1.msra.mxu0 %v404
    %970 = vmatprep.subr.mxu0 %v403
    %971 = vmatpush1.msra.mxu0 %v402
    %972 = vmatprep.subr.mxu0 %v401
    %973 = vmatpush1.msra.mxu0 %v400
    %974 = vmatprep.subr.mxu0 %v399
    %975 = vmatpush1.msra.mxu0 %v398
    %976 = vmatprep.subr.mxu0 %v397
    %977 = vmatpush1.msra.mxu0 %v396
    %978 = vmatprep.subr.mxu0 %v395
    %979 = vmatpush1.msra.mxu0 %v394
    %980 = vmatprep.subr.mxu0 %v393
    %981 = vmatpush1.msra.mxu0 %v392
    %982 = vmatprep.subr.mxu0 0.0
    %983 = vmatpush2.msra.mxu0 0.0
    %984 = vmatprep.subr.mxu0 0.0
    %985 = vmatpush2.msra.mxu0 0.0
    %986 = vmatprep.subr.mxu0 0.0
    %987 = vmatpush2.msra.mxu0 0.0
    %988 = vmatprep.subr.mxu0 0.0
    %989 = vmatpush2.msra.mxu0 0.0
    %990 = vmatprep.subr.mxu0 0.0
    %991 = vmatpush2.msra.mxu0 0.0
    %992 = vmatprep.subr.mxu0 0.0
    %993 = vmatpush2.msra.mxu0 0.0
    %994 = vmatprep.subr.mxu0 0.0
    %995 = vmatpush2.msra.mxu0 0.0
    %996 = vmatprep.subr.mxu0 0.0
    %997 = vmatpush2.msra.mxu0 0.0
    %998 = vmatprep.subr.mxu0 0.0
    %999 = vmatpush2.msra.mxu0 0.0
    %1000 = vmatprep.subr.mxu0 0.0
    %1001 = vmatpush2.msra.mxu0 0.0
    %1002 = vmatprep.subr.mxu0 0.0
    %1003 = vmatpush2.msra.mxu0 0.0
    %1004 = vmatprep.subr.mxu0 0.0
    %1005 = vmatpush2.msra.mxu0 0.0
    %1006 = vmatprep.subr.mxu0 0.0
    %1007 = vmatpush2.msra.mxu0 0.0
    %1008 = vmatprep.subr.mxu0 0.0
    %1009 = vmatpush2.msra.mxu0 0.0
    %1010 = vmatprep.subr.mxu0 0.0
    %1011 = vmatpush2.msra.mxu0 0.0
    %1012 = vmatprep.subr.mxu0 0.0
    %1013 = vmatpush2.msra.mxu0 0.0
    %1014 = vmatprep.mubr.f32.mxu0 0.0
    %1015 = vmatmul.mubr.f32.gmra.mxu0 %v948
    %v1016 = vpop.f32.mrf.mxu0
    %v1017 = vadd.f32 0.0, %v1016
    %v1018 = vpop.f32.mrf.mxu0
    %v1019 = vadd.f32 0.0, %v1018
    %1020 = vdwg.mxu0
    %v1021 = vadd.f32 %v945, %v1017
    %v1022 = vadd.f32 %v946, %v1019
    %v1023 = vmul.f32 %v1021, 0.5
    %v1024 = vmul.f32 %v1022, 0.5
    %v1025 = vtanh.pop %v1023
    %v1026 = vtanh.pop %v1024
    %v1027 = vadd.f32 %v1025, 1.0
    %v1028 = vadd.f32 %v1026, 1.0
    %v1029 = vmul.f32 %v1027, 0.5
    %v1030 = vmul.f32 %v1028, 0.5
    %v1031 = vtanh.pop %v1022
    %v1032 = vmul.f32 %v1029, %v938
    %1034 = vrot.lane.b32.xlu0 %v1031, 64
    %v1035 = vpop.permute.xlu0 %1034
    %v1037 = vmul.f32 %v1029, %v1035
    %1039 = vrot.lane.b32.xlu0 %v1037, 64
    %v1040 = vpop.permute.xlu0 %1039
    %v1042 = vadd.f32 %v1032, %v1040
    %v1043 = vtanh.pop %v1042
    %1045 = vrot.lane.b32.xlu0 %v1043, 64
    %v1046 = vpop.permute.xlu0 %1045
    %v1048 = vmul.f32 %v1030, %v1046
    %v1049 = vsel %vm390, %v519, %v517
    %v1050 = vsel %vm391, %v520, %v518
    %v1052 = vsel %vm414, %v1048, 0
    %1054 = vmatprep.subr.mxu0 0.0
    %1055 = vmatpush1.msra.mxu0 0.0
    %1056 = vmatprep.subr.mxu0 0.0
    %1057 = vmatpush1.msra.mxu0 0.0
    %1058 = vmatprep.subr.mxu0 0.0
    %1059 = vmatpush1.msra.mxu0 0.0
    %1060 = vmatprep.subr.mxu0 0.0
    %1061 = vmatpush1.msra.mxu0 0.0
    %1062 = vmatprep.subr.mxu0 0.0
    %1063 = vmatpush1.msra.mxu0 0.0
    %1064 = vmatprep.subr.mxu0 0.0
    %1065 = vmatpush1.msra.mxu0 0.0
    %1066 = vmatprep.subr.mxu0 0.0
    %1067 = vmatpush1.msra.mxu0 0.0
    %1068 = vmatprep.subr.mxu0 0.0
    %1069 = vmatpush1.msra.mxu0 0.0
    %1070 = vmatprep.subr.mxu0 %v407
    %1071 = vmatpush1.msra.mxu0 %v406
    %1072 = vmatprep.subr.mxu0 %v405
    %1073 = vmatpush1.msra.mxu0 %v404
    %1074 = vmatprep.subr.mxu0 %v403
    %1075 = vmatpush1.msra.mxu0 %v402
    %1076 = vmatprep.subr.mxu0 %v401
    %1077 = vmatpush1.msra.mxu0 %v400
    %1078 = vmatprep.subr.mxu0 %v399
    %1079 = vmatpush1.msra.mxu0 %v398
    %1080 = vmatprep.subr.mxu0 %v397
    %1081 = vmatpush1.msra.mxu0 %v396
    %1082 = vmatprep.subr.mxu0 %v395
    %1083 = vmatpush1.msra.mxu0 %v394
    %1084 = vmatprep.subr.mxu0 %v393
    %1085 = vmatpush1.msra.mxu0 %v392
    %1086 = vmatprep.subr.mxu0 0.0
    %1087 = vmatpush2.msra.mxu0 0.0
    %1088 = vmatprep.subr.mxu0 0.0
    %1089 = vmatpush2.msra.mxu0 0.0
    %1090 = vmatprep.subr.mxu0 0.0
    %1091 = vmatpush2.msra.mxu0 0.0
    %1092 = vmatprep.subr.mxu0 0.0
    %1093 = vmatpush2.msra.mxu0 0.0
    %1094 = vmatprep.subr.mxu0 0.0
    %1095 = vmatpush2.msra.mxu0 0.0
    %1096 = vmatprep.subr.mxu0 0.0
    %1097 = vmatpush2.msra.mxu0 0.0
    %1098 = vmatprep.subr.mxu0 0.0
    %1099 = vmatpush2.msra.mxu0 0.0
    %1100 = vmatprep.subr.mxu0 0.0
    %1101 = vmatpush2.msra.mxu0 0.0
    %1102 = vmatprep.subr.mxu0 0.0
    %1103 = vmatpush2.msra.mxu0 0.0
    %1104 = vmatprep.subr.mxu0 0.0
    %1105 = vmatpush2.msra.mxu0 0.0
    %1106 = vmatprep.subr.mxu0 0.0
    %1107 = vmatpush2.msra.mxu0 0.0
    %1108 = vmatprep.subr.mxu0 0.0
    %1109 = vmatpush2.msra.mxu0 0.0
    %1110 = vmatprep.subr.mxu0 0.0
    %1111 = vmatpush2.msra.mxu0 0.0
    %1112 = vmatprep.subr.mxu0 0.0
    %1113 = vmatpush2.msra.mxu0 0.0
    %1114 = vmatprep.subr.mxu0 0.0
    %1115 = vmatpush2.msra.mxu0 0.0
    %1116 = vmatprep.subr.mxu0 0.0
    %1117 = vmatpush2.msra.mxu0 0.0
    %1118 = vmatprep.mubr.f32.mxu0 0.0
    %1119 = vmatmul.mubr.f32.gmra.mxu0 %v1052
    %v1120 = vpop.f32.mrf.mxu0
    %v1121 = vadd.f32 0.0, %v1120
    %v1122 = vpop.f32.mrf.mxu0
    %v1123 = vadd.f32 0.0, %v1122
    %1124 = vdwg.mxu0
    %v1125 = vadd.f32 %v1049, %v1121
    %v1126 = vadd.f32 %v1050, %v1123
    %v1127 = vmul.f32 %v1125, 0.5
    %v1128 = vmul.f32 %v1126, 0.5
    %v1129 = vtanh.pop %v1127
    %v1130 = vtanh.pop %v1128
    %v1131 = vadd.f32 %v1129, 1.0
    %v1132 = vadd.f32 %v1130, 1.0
    %v1133 = vmul.f32 %v1131, 0.5
    %v1134 = vmul.f32 %v1132, 0.5
    %v1135 = vtanh.pop %v1126
    %v1136 = vmul.f32 %v1133, %v1042
    %1138 = vrot.lane.b32.xlu0 %v1135, 64
    %v1139 = vpop.permute.xlu0 %1138
    %v1141 = vmul.f32 %v1133, %v1139
    %1143 = vrot.lane.b32.xlu0 %v1141, 64
    %v1144 = vpop.permute.xlu0 %1143
    %v1146 = vadd.f32 %v1136, %v1144
    %v1147 = vtanh.pop %v1146
    %1149 = vrot.lane.b32.xlu0 %v1147, 64
    %v1150 = vpop.permute.xlu0 %1149
    %v1152 = vmul.f32 %v1134, %v1150
    %v1153 = vsel %vm390, %v410, %v408
    %v1154 = vsel %vm391, %v411, %v409
    %v1156 = vsel %vm414, %v1152, 0
    %1158 = vmatprep.subr.mxu0 0.0
    %1159 = vmatpush1.msra.mxu0 0.0
    %1160 = vmatprep.subr.mxu0 0.0
    %1161 = vmatpush1.msra.mxu0 0.0
    %1162 = vmatprep.subr.mxu0 0.0
    %1163 = vmatpush1.msra.mxu0 0.0
    %1164 = vmatprep.subr.mxu0 0.0
    %1165 = vmatpush1.msra.mxu0 0.0
    %1166 = vmatprep.subr.mxu0 0.0
    %1167 = vmatpush1.msra.mxu0 0.0
    %1168 = vmatprep.subr.mxu0 0.0
    %1169 = vmatpush1.msra.mxu0 0.0
    %1170 = vmatprep.subr.mxu0 0.0
    %1171 = vmatpush1.msra.mxu0 0.0
    %1172 = vmatprep.subr.mxu0 0.0
    %1173 = vmatpush1.msra.mxu0 0.0
    %1174 = vmatprep.subr.mxu0 %v407
    %1175 = vmatpush1.msra.mxu0 %v406
    %1176 = vmatprep.subr.mxu0 %v405
    %1177 = vmatpush1.msra.mxu0 %v404
    %1178 = vmatprep.subr.mxu0 %v403
    %1179 = vmatpush1.msra.mxu0 %v402
    %1180 = vmatprep.subr.mxu0 %v401
    %1181 = vmatpush1.msra.mxu0 %v400
    %1182 = vmatprep.subr.mxu0 %v399
    %1183 = vmatpush1.msra.mxu0 %v398
    %1184 = vmatprep.subr.mxu0 %v397
    %1185 = vmatpush1.msra.mxu0 %v396
    %1186 = vmatprep.subr.mxu0 %v395
    %1187 = vmatpush1.msra.mxu0 %v394
    %1188 = vmatprep.subr.mxu0 %v393
    %1189 = vmatpush1.msra.mxu0 %v392
    %1190 = vmatprep.subr.mxu0 0.0
    %1191 = vmatpush2.msra.mxu0 0.0
    %1192 = vmatprep.subr.mxu0 0.0
    %1193 = vmatpush2.msra.mxu0 0.0
    %1194 = vmatprep.subr.mxu0 0.0
    %1195 = vmatpush2.msra.mxu0 0.0
    %1196 = vmatprep.subr.mxu0 0.0
    %1197 = vmatpush2.msra.mxu0 0.0
    %1198 = vmatprep.subr.mxu0 0.0
    %1199 = vmatpush2.msra.mxu0 0.0
    %1200 = vmatprep.subr.mxu0 0.0
    %1201 = vmatpush2.msra.mxu0 0.0
    %1202 = vmatprep.subr.mxu0 0.0
    %1203 = vmatpush2.msra.mxu0 0.0
    %1204 = vmatprep.subr.mxu0 0.0
    %1205 = vmatpush2.msra.mxu0 0.0
    %1206 = vmatprep.subr.mxu0 0.0
    %1207 = vmatpush2.msra.mxu0 0.0
    %1208 = vmatprep.subr.mxu0 0.0
    %1209 = vmatpush2.msra.mxu0 0.0
    %1210 = vmatprep.subr.mxu0 0.0
    %1211 = vmatpush2.msra.mxu0 0.0
    %1212 = vmatprep.subr.mxu0 0.0
    %1213 = vmatpush2.msra.mxu0 0.0
    %1214 = vmatprep.subr.mxu0 0.0
    %1215 = vmatpush2.msra.mxu0 0.0
    %1216 = vmatprep.subr.mxu0 0.0
    %1217 = vmatpush2.msra.mxu0 0.0
    %1218 = vmatprep.subr.mxu0 0.0
    %1219 = vmatpush2.msra.mxu0 0.0
    %1220 = vmatprep.subr.mxu0 0.0
    %1221 = vmatpush2.msra.mxu0 0.0
    %1222 = vmatprep.mubr.f32.mxu0 0.0
    %1223 = vmatmul.mubr.f32.gmra.mxu0 %v1156
    %v1224 = vpop.f32.mrf.mxu0
    %v1225 = vadd.f32 0.0, %v1224
    %v1226 = vpop.f32.mrf.mxu0
    %v1227 = vadd.f32 0.0, %v1226
    %1228 = vdwg.mxu0
    %v1229 = vadd.f32 %v1153, %v1225
    %v1230 = vadd.f32 %v1154, %v1227
    %v1231 = vmul.f32 %v1229, 0.5
    %v1232 = vmul.f32 %v1230, 0.5
    %v1233 = vtanh.pop %v1231
    %v1234 = vtanh.pop %v1232
    %v1235 = vadd.f32 %v1233, 1.0
    %v1236 = vadd.f32 %v1234, 1.0
    %v1237 = vmul.f32 %v1235, 0.5
    %v1238 = vmul.f32 %v1236, 0.5
    %v1239 = vtanh.pop %v1230
    %v1240 = vmul.f32 %v1237, %v1146
    %1242 = vrot.lane.b32.xlu0 %v1239, 64
    %v1243 = vpop.permute.xlu0 %1242
    %v1245 = vmul.f32 %v1237, %v1243
    %1247 = vrot.lane.b32.xlu0 %v1245, 64
    %v1248 = vpop.permute.xlu0 %1247
    %v1250 = vadd.f32 %v1240, %v1248
    %v1251 = vtanh.pop %v1250
    %1253 = vrot.lane.b32.xlu0 %v1251, 64
    %v1254 = vpop.permute.xlu0 %1253
    %v1256 = vmul.f32 %v1238, %v1254
    %v1257 = vld [vmem:[#allocation10] sm:$0xff]
    %v1258 = vld [vmem:[#allocation10 + $0x8] sm:$0xff]
    %v1259 = vld [vmem:[#allocation10 + $0x10] sm:$0xff]
    %v1260 = vld [vmem:[#allocation10 + $0x18] sm:$0xff]
    %v1261 = vld [vmem:[#allocation10 + $0x20] sm:$0xff]
    %v1262 = vld [vmem:[#allocation10 + $0x28] sm:$0xff]
    %v1263 = vld [vmem:[#allocation10 + $0x30] sm:$0xff]
    %v1264 = vld [vmem:[#allocation10 + $0x38] sm:$0xff]
    %v1265 = vld [vmem:[%s7] sm:$0x1]
    %v1267 = vlaneseq
    %v1268 = vshrl.u32 %v1267, 7
    %v1269 = vsub.s32 0, %v1268
    %v1270 = vrot.slane %v1265, %v1269
    %v1273 = vsel %vm414, %v1256, 0
    %1275 = vmatprep.subr.mxu0 0.0
    %1276 = vmatpush1.msra.mxu0 0.0
    %1277 = vmatprep.subr.mxu0 0.0
    %1278 = vmatpush1.msra.mxu0 0.0
    %1279 = vmatprep.subr.mxu0 0.0
    %1280 = vmatpush1.msra.mxu0 0.0
    %1281 = vmatprep.subr.mxu0 0.0
    %1282 = vmatpush1.msra.mxu0 0.0
    %1283 = vmatprep.subr.mxu0 0.0
    %1284 = vmatpush1.msra.mxu0 0.0
    %1285 = vmatprep.subr.mxu0 0.0
    %1286 = vmatpush1.msra.mxu0 0.0
    %1287 = vmatprep.subr.mxu0 0.0
    %1288 = vmatpush1.msra.mxu0 0.0
    %1289 = vmatprep.subr.mxu0 0.0
    %1290 = vmatpush1.msra.mxu0 0.0
    %1291 = vmatprep.subr.mxu0 0.0
    %1292 = vmatpush1.msra.mxu0 %v1264
    %1293 = vmatprep.subr.mxu0 0.0
    %1294 = vmatpush1.msra.mxu0 %v1263
    %1295 = vmatprep.subr.mxu0 0.0
    %1296 = vmatpush1.msra.mxu0 %v1262
    %1297 = vmatprep.subr.mxu0 0.0
    %1298 = vmatpush1.msra.mxu0 %v1261
    %1299 = vmatprep.subr.mxu0 0.0
    %1300 = vmatpush1.msra.mxu0 %v1260
    %1301 = vmatprep.subr.mxu0 0.0
    %1302 = vmatpush1.msra.mxu0 %v1259
    %1303 = vmatprep.subr.mxu0 0.0
    %1304 = vmatpush1.msra.mxu0 %v1258
    %1305 = vmatprep.subr.mxu0 0.0
    %1306 = vmatpush1.msra.mxu0 %v1257
    %1307 = vmatprep.subr.mxu0 0.0
    %1308 = vmatpush2.msra.mxu0 0.0
    %1309 = vmatprep.subr.mxu0 0.0
    %1310 = vmatpush2.msra.mxu0 0.0
    %1311 = vmatprep.subr.mxu0 0.0
    %1312 = vmatpush2.msra.mxu0 0.0
    %1313 = vmatprep.subr.mxu0 0.0
    %1314 = vmatpush2.msra.mxu0 0.0
    %1315 = vmatprep.subr.mxu0 0.0
    %1316 = vmatpush2.msra.mxu0 0.0
    %1317 = vmatprep.subr.mxu0 0.0
    %1318 = vmatpush2.msra.mxu0 0.0
    %1319 = vmatprep.subr.mxu0 0.0
    %1320 = vmatpush2.msra.mxu0 0.0
    %1321 = vmatprep.subr.mxu0 0.0
    %1322 = vmatpush2.msra.mxu0 0.0
    %1323 = vmatprep.subr.mxu0 0.0
    %1324 = vmatpush2.msra.mxu0 0.0
    %1325 = vmatprep.subr.mxu0 0.0
    %1326 = vmatpush2.msra.mxu0 0.0
    %1327 = vmatprep.subr.mxu0 0.0
    %1328 = vmatpush2.msra.mxu0 0.0
    %1329 = vmatprep.subr.mxu0 0.0
    %1330 = vmatpush2.msra.mxu0 0.0
    %1331 = vmatprep.subr.mxu0 0.0
    %1332 = vmatpush2.msra.mxu0 0.0
    %1333 = vmatprep.subr.mxu0 0.0
    %1334 = vmatpush2.msra.mxu0 0.0
    %1335 = vmatprep.subr.mxu0 0.0
    %1336 = vmatpush2.msra.mxu0 0.0
    %1337 = vmatprep.subr.mxu0 0.0
    %1338 = vmatpush2.msra.mxu0 0.0
    %1339 = vmatprep.mubr.f32.mxu0 0.0
    %1340 = vmatmul.mubr.f32.gmra.mxu0 %v1273
    %v1341 = vpop.f32.mrf.mxu0
    %v1342 = vadd.f32 %v1270, %v1341
    %v1343 = vpop.f32.mrf.mxu0
    %1344 = vdwg.mxu0
    %1345 = vst [vmem:[%s8] sm:$0xff] %v1342
    // Predicated region
    $region50: #{lstm_add_forward.1} parent=1 // pred_check
      _
    $region51: #{lstm_add_forward.1} parent=1 // pred_check_branch
      %1347 = sbr.rel (0) target = $region53
    $region52: #{lstm_add_forward.1} parent=1 // pred_region
      _
    $region53: #{lstm_add_forward.1} parent=1 // pred_fallthru
      _
    // Predicated region
    $region54: #{lstm_add_forward.1} parent=1 // pred_check
      _
    $region55: #{lstm_add_forward.1} parent=1 // pred_check_branch
      %1349 = sbr.rel (0) target = $region57
    $region56: #{lstm_add_forward.1} parent=1 // pred_region
      _
    $region57: #{lstm_add_forward.1} parent=1 // pred_fallthru
      _
    %1350 = vsyncpa [#allocation5], 1
    %1351 = vsyncpa [#allocation11], 1
    %1352 = vsyncpa [#allocation6], 1
    %1353 = vsyncpa [#allocation8], 1

</llo_original>
